<compile_context>
chip_gen: v5e
topology: v5e:2x2
jax: 0.10.0
libtpu: 0.0.40
codegen_flags: <defaults>
</compile_context>

<pallas_src>
import jax
import jax.numpy as jnp
from jax import lax
from jax.experimental import pallas as pl
from jax.experimental.pallas import tpu as pltpu


def encoder_gru_kernel(tok_ref,             # (T*B, 1) int32  time-major token ids
                       emb_ref,             # (V, H)          embedding table (VMEM resident)
                       wih_ref, whh_ref,    # (H, 3*LG)       lane-padded weights, gate g at [g*LG : g*LG+H]
                       bias_ref,            # (1, 3*LG)       lane-padded (b_ir+b_hr | b_iz+b_hz | b_in)
                       bhn_ref,             # (1, H)          b_hn (stays inside the r*(...) term)
                       out_ref,             # (T*B, H)        time-major GRU outputs
                       hlast_ref):          # (B, H)          final hidden state
    TB, H = out_ref.shape
    B = hlast_ref.shape[0]
    T = TB // B
    V = emb_ref.shape[0]
    LG = whh_ref.shape[1] // 3            # 128-lane group per gate

    # ---- fused embedding gather as a one-hot MXU matmul (no serial scalar loads) --------
    tok = tok_ref[...]                                            # (TB, 1) int32
    iota = lax.broadcasted_iota(jnp.int32, (TB, V), 1)
    onehot = (iota == tok).astype(jnp.float32)                    # OOV token -> all-zero row
    x = jnp.dot(onehot, emb_ref[...], preferred_element_type=jnp.float32)   # (TB, H)
    # Dropout(p=0.1) is identity here (inference semantics).
    # TODO(synk): training-mode dropout (PyTorch RNG parity) has no exact Pallas equivalent.

    # ---- input projection for ALL timesteps: ONE padded matmul, biases folded -----------
    gi = jnp.dot(x, wih_ref[...], preferred_element_type=jnp.float32) + bias_ref[...]
    gi_r = gi[:, 0:H]                      # lane offsets 0 / 128 / 256 -> vreg-aligned
    gi_z = gi[:, LG:LG + H]
    gi_n = gi[:, 2 * LG:2 * LG + H]

    whh = whh_ref[...]                                            # hoisted weight load
    b_hn = jnp.broadcast_to(bhn_ref[...], (B, H))                 # hoisted broadcast

    # ---- t = 0 peeled: h0 == 0, so h @ W_hh == 0 -----------------------------------------
    r = jax.nn.sigmoid(gi_r[0:B, :])
    z = jax.nn.sigmoid(gi_z[0:B, :])
    n = jnp.tanh(gi_n[0:B, :] + r * b_hn)
    h = (1.0 - z) * n
    hs = [h]

    # ---- recurrence: ONE fused (B,H)x(H,3*LG) matmul per step, fully unrolled ------------
    for t in range(1, T):                                         # static unroll (T small)
        gh = jnp.dot(h, whh, preferred_element_type=jnp.float32)  # (B, 3*LG)
        r = jax.nn.sigmoid(gi_r[t * B:(t + 1) * B, :] + gh[:, 0:H])
        z = jax.nn.sigmoid(gi_z[t * B:(t + 1) * B, :] + gh[:, LG:LG + H])
        n = jnp.tanh(gi_n[t * B:(t + 1) * B, :] + r * (gh[:, 2 * LG:2 * LG + H] + b_hn))
        h = (1.0 - z) * n + z * h
        hs.append(h)

    # ---- single full-tile store of the whole output; final hidden written once -----------
    out_ref[...] = jnp.concatenate(hs, axis=0).astype(out_ref.dtype)   # (T*B, H) time-major
    hlast_ref[...] = h.astype(hlast_ref.dtype)


def encoder_forward(tokens, embedding, w_ih, w_hh, b_ih, b_hh):
    B, T = tokens.shape
    V, H = embedding.shape
    LG = ((H + 127) // 128) * 128          # one 128-lane group per gate (H=32 -> 128)

    def pad_gates(m):                      # (..., 3H) -> (..., 3*LG), gate g at [g*LG : g*LG+H]
        parts = []
        zeros = jnp.zeros(m.shape[:-1] + (LG - H,), m.dtype)
        for g in range(3):
            parts.append(jnp.concatenate([m[..., g * H:(g + 1) * H], zeros], axis=-1))
        return jnp.concatenate(parts, axis=-1)

    wih_pad = pad_gates(w_ih)              # (H, 3*LG)
    whh_pad = pad_gates(w_hh)              # (H, 3*LG)
    # r/z hidden biases sit outside the r-gate product -> fold them into the input bias once;
    # b_hn stays separate (it lives inside the r*(...) term of the n gate).
    bias_fused = jnp.concatenate(
        [b_ih[:, 0:H] + b_hh[:, 0:H],
         b_ih[:, H:2 * H] + b_hh[:, H:2 * H],
         b_ih[:, 2 * H:3 * H]], axis=-1)   # (1, 3H)
    bias_pad = pad_ates = pad_gates(bias_fused)   # (1, 3*LG)
    b_hn = b_hh[:, 2 * H:3 * H]            # (1, H)

    tok_tm = tokens.astype(jnp.int32).T.reshape(T * B, 1)   # time-major: row t*B+b = tokens[b,t]

    # NOTE(v7x): grid=(1,) pins this to a single TensorCore -- fine at B=2; for larger batches
    # add a leading 'parallel' grid axis over batch blocks so both TCs split the recurrence.
    # NOTE(scaling): the VMEM-resident (V,H) table is a small-vocab strategy; at realistic vocab
    # sizes switch it to memory_space=pl.ANY + manual DMA gather.
    out_flat, h_last = pl.pallas_call(
        encoder_gru_kernel,
        out_shape=(
            jax.ShapeDtypeStruct((T * B, H), jnp.float32),   # time-major outputs
            jax.ShapeDtypeStruct((B, H), jnp.float32),       # final hidden
        ),
        grid_spec=pltpu.PrefetchScalarGridSpec(
            num_scalar_prefetch=0,
            grid=(1,),                                       # whole recurrence in ONE invocation
            in_specs=[
                pl.BlockSpec((T * B, 1), lambda i: (0, 0)),        # tokens (VMEM)
                pl.BlockSpec((V, H), lambda i: (0, 0)),            # embedding table
                pl.BlockSpec((H, 3 * LG), lambda i: (0, 0)),       # padded W_ih
                pl.BlockSpec((H, 3 * LG), lambda i: (0, 0)),       # padded W_hh
                pl.BlockSpec((1, 3 * LG), lambda i: (0, 0)),       # padded fused bias
                pl.BlockSpec((1, H), lambda i: (0, 0)),            # b_hn
            ],
            out_specs=[
                pl.BlockSpec((T * B, H), lambda i: (0, 0)),
                pl.BlockSpec((B, H), lambda i: (0, 0)),
            ],
        ),
        compiler_params=pltpu.CompilerParams(
            dimension_semantics=("arbitrary",)),
    )(tok_tm, embedding, wih_pad, whh_pad, bias_pad, b_hn)

    out = out_flat.reshape(T, B, H).transpose(1, 0, 2)       # (B, T, H) batch-first (tiny)
    return out, h_last[None]                                 # hidden: (1, B, H)


def reference_forward(tokens, embedding, w_ih, w_hh, b_ih, b_hh):
    """Pure-JAX GRU reference (same PyTorch gate equations)."""
    B, T = tokens.shape
    H = embedding.shape[1]
    x = jnp.take(embedding, tokens, axis=0)              # (B, T, H)

    def step(h, x_t):
        gi = x_t @ w_ih + b_ih
        gh = h @ w_hh + b_hh
        i_r, i_z, i_n = gi[:, :H], gi[:, H:2 * H], gi[:, 2 * H:]
        h_r, h_z, h_n = gh[:, :H], gh[:, H:2 * H], gh[:, 2 * H:]
        r = jax.nn.sigmoid(i_r + h_r)
        z = jax.nn.sigmoid(i_z + h_z)
        n = jnp.tanh(i_n + r * h_n)
        h_new = (1.0 - z) * n + z * h
        return h_new, h_new

    h0 = jnp.zeros((B, H), jnp.float32)
    h_last, outs = jax.lax.scan(step, h0, jnp.transpose(x, (1, 0, 2)))
    return jnp.transpose(outs, (1, 0, 2)), h_last[None]


if __name__ == "__main__":
    # Small shapes consistent with the module's forward.
    V = 50          # input_size (vocab)
    H = 32          # hidden_size
    B = 2           # batch
    T = 8           # sequence length

    key = jax.random.PRNGKey(0)
    k_emb, k_wih, k_whh, k_bih, k_bhh, k_tok = jax.random.split(key, 6)

    embedding = jax.random.normal(k_emb, (V, H), jnp.float32)
    bound = 1.0 / jnp.sqrt(H)
    w_ih = jax.random.uniform(k_wih, (H, 3 * H), jnp.float32, -bound, bound)
    w_hh = jax.random.uniform(k_whh, (H, 3 * H), jnp.float32, -bound, bound)
    b_ih = jax.random.uniform(k_bih, (1, 3 * H), jnp.float32, -bound, bound)
    b_hh = jax.random.uniform(k_bhh, (1, 3 * H), jnp.float32, -bound, bound)

    tokens = jax.random.randint(k_tok, (B, T), 0, V, jnp.int32)

    out, hidden = jax.jit(encoder_forward)(tokens, embedding, w_ih, w_hh, b_ih, b_hh)
    out = jax.block_until_ready(out)
    hidden = jax.block_until_ready(hidden)

    ref_out, ref_hidden = reference_forward(tokens, embedding, w_ih, w_hh, b_ih, b_hh)

    assert out.shape == (B, T, H) and hidden.shape == (1, B, H)
    assert jnp.allclose(out, ref_out, atol=1e-5, rtol=1e-5)
    assert jnp.allclose(hidden, ref_hidden, atol=1e-5, rtol=1e-5)

    print("KERNEL_OK")
</pallas_src>

<mosaic_0001>
module attributes {stable_mosaic.version = 11 : i64} {
  func.func @encoder_gru_kernel(%arg0: i32, %arg1: memref<16x1xi32, #tpu.memory_space<vmem>>, %arg2: memref<50x32xf32, #tpu.memory_space<vmem>>, %arg3: memref<32x384xf32, #tpu.memory_space<vmem>>, %arg4: memref<32x384xf32, #tpu.memory_space<vmem>>, %arg5: memref<1x384xf32, #tpu.memory_space<vmem>>, %arg6: memref<1x32xf32, #tpu.memory_space<vmem>>, %arg7: memref<16x32xf32, #tpu.memory_space<vmem>>, %arg8: memref<2x32xf32, #tpu.memory_space<vmem>>) attributes {dimension_semantics = [#tpu.dimension_semantics<arbitrary>], iteration_bounds = array<i64: 1>, scalar_prefetch = 0 : i64, scratch_operands = 0 : i64, tpu.core_type = #tpu.core_type<tc>, window_params = [{pipeline_mode = #tpu.pipeline_mode<synchronous>, transform_indices = @transform_0, window_bounds = array<i64: 16, 1>}, {pipeline_mode = #tpu.pipeline_mode<synchronous>, transform_indices = @transform_1, window_bounds = array<i64: 50, 32>}, {pipeline_mode = #tpu.pipeline_mode<synchronous>, transform_indices = @transform_2, window_bounds = array<i64: 32, 384>}, {pipeline_mode = #tpu.pipeline_mode<synchronous>, transform_indices = @transform_3, window_bounds = array<i64: 32, 384>}, {pipeline_mode = #tpu.pipeline_mode<synchronous>, transform_indices = @transform_4, window_bounds = array<i64: 1, 384>}, {pipeline_mode = #tpu.pipeline_mode<synchronous>, transform_indices = @transform_5, window_bounds = array<i64: 1, 32>}, {pipeline_mode = #tpu.pipeline_mode<synchronous>, transform_indices = @transform_6, window_bounds = array<i64: 16, 32>}, {pipeline_mode = #tpu.pipeline_mode<synchronous>, transform_indices = @transform_7, window_bounds = array<i64: 2, 32>}]} {
    %c0 = arith.constant 0 : index
    %c0_0 = arith.constant 0 : index
    %0 = vector.load %arg1[%c0, %c0_0] : memref<16x1xi32, #tpu.memory_space<vmem>>, vector<16x1xi32>
    %1 = tpu.iota {dimensions = array<i32: 1>} : vector<16x50xi32>
    %2 = vector.broadcast %0 : vector<16x1xi32> to vector<16x50xi32>
    %3 = arith.cmpi eq, %1, %2 : vector<16x50xi32>
    %4 = arith.extui %3 : vector<16x50xi1> to vector<16x50xi32>
    %5 = arith.sitofp %4 : vector<16x50xi32> to vector<16x50xf32>
    %c0_1 = arith.constant 0 : index
    %c0_2 = arith.constant 0 : index
    %6 = vector.load %arg2[%c0_1, %c0_2] : memref<50x32xf32, #tpu.memory_space<vmem>>, vector<50x32xf32>
    %cst = arith.constant dense<0.000000e+00> : vector<16x32xf32>
    %7 = tpu.matmul %5, %6, %cst {dimension_numbers = #tpu.dot_dimension_numbers<[1], [0], [0], [1], [0, 0, 1, 1], [], []>} : vector<16x50xf32>, vector<50x32xf32>, vector<16x32xf32> -> vector<16x32xf32>
    %c0_3 = arith.constant 0 : index
    %c0_4 = arith.constant 0 : index
    %8 = vector.load %arg3[%c0_3, %c0_4] : memref<32x384xf32, #tpu.memory_space<vmem>>, vector<32x384xf32>
    %cst_5 = arith.constant dense<0.000000e+00> : vector<16x384xf32>
    %9 = tpu.matmul %7, %8, %cst_5 {dimension_numbers = #tpu.dot_dimension_numbers<[1], [0], [0], [1], [0, 0, 1, 1], [], []>} : vector<16x32xf32>, vector<32x384xf32>, vector<16x384xf32> -> vector<16x384xf32>
    %c0_6 = arith.constant 0 : index
    %c0_7 = arith.constant 0 : index
    %10 = vector.load %arg5[%c0_6, %c0_7] : memref<1x384xf32, #tpu.memory_space<vmem>>, vector<1x384xf32>
    %11 = vector.broadcast %10 : vector<1x384xf32> to vector<16x384xf32>
    %12 = arith.addf %9, %11 : vector<16x384xf32>
    %13 = vector.extract_strided_slice %12 {offsets = [0, 0], sizes = [16, 32], strides = [1, 1]} : vector<16x384xf32> to vector<16x32xf32>
    %14 = vector.extract_strided_slice %12 {offsets = [0, 128], sizes = [16, 32], strides = [1, 1]} : vector<16x384xf32> to vector<16x32xf32>
    %15 = vector.extract_strided_slice %12 {offsets = [0, 256], sizes = [16, 32], strides = [1, 1]} : vector<16x384xf32> to vector<16x32xf32>
    %c0_8 = arith.constant 0 : index
    %c0_9 = arith.constant 0 : index
    %16 = vector.load %arg4[%c0_8, %c0_9] : memref<32x384xf32, #tpu.memory_space<vmem>>, vector<32x384xf32>
    %c0_10 = arith.constant 0 : index
    %c0_11 = arith.constant 0 : index
    %17 = vector.load %arg6[%c0_10, %c0_11] : memref<1x32xf32, #tpu.memory_space<vmem>>, vector<1x32xf32>
    %18 = vector.shape_cast %17 : vector<1x32xf32> to vector<1x32xf32>
    %19 = vector.broadcast %18 : vector<1x32xf32> to vector<2x32xf32>
    %20 = vector.extract_strided_slice %13 {offsets = [0, 0], sizes = [2, 32], strides = [1, 1]} : vector<16x32xf32> to vector<2x32xf32>
    %21 = arith.negf %20 : vector<2x32xf32>
    %22 = math.exp %21 : vector<2x32xf32>
    %cst_12 = arith.constant 1.000000e+00 : f32
    %23 = vector.broadcast %cst_12 : f32 to vector<2x32xf32>
    %24 = arith.addf %23, %22 : vector<2x32xf32>
    %25 = arith.divf %23, %24 : vector<2x32xf32>
    %26 = vector.extract_strided_slice %14 {offsets = [0, 0], sizes = [2, 32], strides = [1, 1]} : vector<16x32xf32> to vector<2x32xf32>
    %27 = arith.negf %26 : vector<2x32xf32>
    %28 = math.exp %27 : vector<2x32xf32>
    %cst_13 = arith.constant 1.000000e+00 : f32
    %29 = vector.broadcast %cst_13 : f32 to vector<2x32xf32>
    %30 = arith.addf %29, %28 : vector<2x32xf32>
    %31 = arith.divf %29, %30 : vector<2x32xf32>
    %32 = vector.extract_strided_slice %15 {offsets = [0, 0], sizes = [2, 32], strides = [1, 1]} : vector<16x32xf32> to vector<2x32xf32>
    %33 = arith.mulf %25, %19 : vector<2x32xf32>
    %34 = arith.addf %32, %33 : vector<2x32xf32>
    %35 = math.tanh %34 : vector<2x32xf32>
    %cst_14 = arith.constant 1.000000e+00 : f32
    %36 = vector.broadcast %cst_14 : f32 to vector<2x32xf32>
    %37 = arith.subf %36, %31 : vector<2x32xf32>
    %38 = arith.mulf %37, %35 : vector<2x32xf32>
    %cst_15 = arith.constant dense<0.000000e+00> : vector<2x384xf32>
    %39 = tpu.matmul %38, %16, %cst_15 {dimension_numbers = #tpu.dot_dimension_numbers<[1], [0], [0], [1], [0, 0, 1, 1], [], []>} : vector<2x32xf32>, vector<32x384xf32>, vector<2x384xf32> -> vector<2x384xf32>
    %40 = vector.extract_strided_slice %13 {offsets = [2, 0], sizes = [2, 32], strides = [1, 1]} : vector<16x32xf32> to vector<2x32xf32>
    %41 = vector.extract_strided_slice %39 {offsets = [0, 0], sizes = [2, 32], strides = [1, 1]} : vector<2x384xf32> to vector<2x32xf32>
    %42 = arith.addf %40, %41 : vector<2x32xf32>
    %43 = arith.negf %42 : vector<2x32xf32>
    %44 = math.exp %43 : vector<2x32xf32>
    %cst_16 = arith.constant 1.000000e+00 : f32
    %45 = vector.broadcast %cst_16 : f32 to vector<2x32xf32>
    %46 = arith.addf %45, %44 : vector<2x32xf32>
    %47 = arith.divf %45, %46 : vector<2x32xf32>
    %48 = vector.extract_strided_slice %14 {offsets = [2, 0], sizes = [2, 32], strides = [1, 1]} : vector<16x32xf32> to vector<2x32xf32>
    %49 = vector.extract_strided_slice %39 {offsets = [0, 128], sizes = [2, 32], strides = [1, 1]} : vector<2x384xf32> to vector<2x32xf32>
    %50 = arith.addf %48, %49 : vector<2x32xf32>
    %51 = arith.negf %50 : vector<2x32xf32>
    %52 = math.exp %51 : vector<2x32xf32>
    %cst_17 = arith.constant 1.000000e+00 : f32
    %53 = vector.broadcast %cst_17 : f32 to vector<2x32xf32>
    %54 = arith.addf %53, %52 : vector<2x32xf32>
    %55 = arith.divf %53, %54 : vector<2x32xf32>
    %56 = vector.extract_strided_slice %15 {offsets = [2, 0], sizes = [2, 32], strides = [1, 1]} : vector<16x32xf32> to vector<2x32xf32>
    %57 = vector.extract_strided_slice %39 {offsets = [0, 256], sizes = [2, 32], strides = [1, 1]} : vector<2x384xf32> to vector<2x32xf32>
    %58 = arith.addf %57, %19 : vector<2x32xf32>
    %59 = arith.mulf %47, %58 : vector<2x32xf32>
    %60 = arith.addf %56, %59 : vector<2x32xf32>
    %61 = math.tanh %60 : vector<2x32xf32>
    %cst_18 = arith.constant 1.000000e+00 : f32
    %62 = vector.broadcast %cst_18 : f32 to vector<2x32xf32>
    %63 = arith.subf %62, %55 : vector<2x32xf32>
    %64 = arith.mulf %63, %61 : vector<2x32xf32>
    %65 = arith.mulf %55, %38 : vector<2x32xf32>
    %66 = arith.addf %64, %65 : vector<2x32xf32>
    %cst_19 = arith.constant dense<0.000000e+00> : vector<2x384xf32>
    %67 = tpu.matmul %66, %16, %cst_19 {dimension_numbers = #tpu.dot_dimension_numbers<[1], [0], [0], [1], [0, 0, 1, 1], [], []>} : vector<2x32xf32>, vector<32x384xf32>, vector<2x384xf32> -> vector<2x384xf32>
    %68 = vector.extract_strided_slice %13 {offsets = [4, 0], sizes = [2, 32], strides = [1, 1]} : vector<16x32xf32> to vector<2x32xf32>
    %69 = vector.extract_strided_slice %67 {offsets = [0, 0], sizes = [2, 32], strides = [1, 1]} : vector<2x384xf32> to vector<2x32xf32>
    %70 = arith.addf %68, %69 : vector<2x32xf32>
    %71 = arith.negf %70 : vector<2x32xf32>
    %72 = math.exp %71 : vector<2x32xf32>
    %cst_20 = arith.constant 1.000000e+00 : f32
    %73 = vector.broadcast %cst_20 : f32 to vector<2x32xf32>
    %74 = arith.addf %73, %72 : vector<2x32xf32>
    %75 = arith.divf %73, %74 : vector<2x32xf32>
    %76 = vector.extract_strided_slice %14 {offsets = [4, 0], sizes = [2, 32], strides = [1, 1]} : vector<16x32xf32> to vector<2x32xf32>
    %77 = vector.extract_strided_slice %67 {offsets = [0, 128], sizes = [2, 32], strides = [1, 1]} : vector<2x384xf32> to vector<2x32xf32>
    %78 = arith.addf %76, %77 : vector<2x32xf32>
    %79 = arith.negf %78 : vector<2x32xf32>
    %80 = math.exp %79 : vector<2x32xf32>
    %cst_21 = arith.constant 1.000000e+00 : f32
    %81 = vector.broadcast %cst_21 : f32 to vector<2x32xf32>
    %82 = arith.addf %81, %80 : vector<2x32xf32>
    %83 = arith.divf %81, %82 : vector<2x32xf32>
    %84 = vector.extract_strided_slice %15 {offsets = [4, 0], sizes = [2, 32], strides = [1, 1]} : vector<16x32xf32> to vector<2x32xf32>
    %85 = vector.extract_strided_slice %67 {offsets = [0, 256], sizes = [2, 32], strides = [1, 1]} : vector<2x384xf32> to vector<2x32xf32>
    %86 = arith.addf %85, %19 : vector<2x32xf32>
    %87 = arith.mulf %75, %86 : vector<2x32xf32>
    %88 = arith.addf %84, %87 : vector<2x32xf32>
    %89 = math.tanh %88 : vector<2x32xf32>
    %cst_22 = arith.constant 1.000000e+00 : f32
    %90 = vector.broadcast %cst_22 : f32 to vector<2x32xf32>
    %91 = arith.subf %90, %83 : vector<2x32xf32>
    %92 = arith.mulf %91, %89 : vector<2x32xf32>
    %93 = arith.mulf %83, %66 : vector<2x32xf32>
    %94 = arith.addf %92, %93 : vector<2x32xf32>
    %cst_23 = arith.constant dense<0.000000e+00> : vector<2x384xf32>
    %95 = tpu.matmul %94, %16, %cst_23 {dimension_numbers = #tpu.dot_dimension_numbers<[1], [0], [0], [1], [0, 0, 1, 1], [], []>} : vector<2x32xf32>, vector<32x384xf32>, vector<2x384xf32> -> vector<2x384xf32>
    %96 = vector.extract_strided_slice %13 {offsets = [6, 0], sizes = [2, 32], strides = [1, 1]} : vector<16x32xf32> to vector<2x32xf32>
    %97 = vector.extract_strided_slice %95 {offsets = [0, 0], sizes = [2, 32], strides = [1, 1]} : vector<2x384xf32> to vector<2x32xf32>
    %98 = arith.addf %96, %97 : vector<2x32xf32>
    %99 = arith.negf %98 : vector<2x32xf32>
    %100 = math.exp %99 : vector<2x32xf32>
    %cst_24 = arith.constant 1.000000e+00 : f32
    %101 = vector.broadcast %cst_24 : f32 to vector<2x32xf32>
    %102 = arith.addf %101, %100 : vector<2x32xf32>
    %103 = arith.divf %101, %102 : vector<2x32xf32>
    %104 = vector.extract_strided_slice %14 {offsets = [6, 0], sizes = [2, 32], strides = [1, 1]} : vector<16x32xf32> to vector<2x32xf32>
    %105 = vector.extract_strided_slice %95 {offsets = [0, 128], sizes = [2, 32], strides = [1, 1]} : vector<2x384xf32> to vector<2x32xf32>
    %106 = arith.addf %104, %105 : vector<2x32xf32>
    %107 = arith.negf %106 : vector<2x32xf32>
    %108 = math.exp %107 : vector<2x32xf32>
    %cst_25 = arith.constant 1.000000e+00 : f32
    %109 = vector.broadcast %cst_25 : f32 to vector<2x32xf32>
    %110 = arith.addf %109, %108 : vector<2x32xf32>
    %111 = arith.divf %109, %110 : vector<2x32xf32>
    %112 = vector.extract_strided_slice %15 {offsets = [6, 0], sizes = [2, 32], strides = [1, 1]} : vector<16x32xf32> to vector<2x32xf32>
    %113 = vector.extract_strided_slice %95 {offsets = [0, 256], sizes = [2, 32], strides = [1, 1]} : vector<2x384xf32> to vector<2x32xf32>
    %114 = arith.addf %113, %19 : vector<2x32xf32>
    %115 = arith.mulf %103, %114 : vector<2x32xf32>
    %116 = arith.addf %112, %115 : vector<2x32xf32>
    %117 = math.tanh %116 : vector<2x32xf32>
    %cst_26 = arith.constant 1.000000e+00 : f32
    %118 = vector.broadcast %cst_26 : f32 to vector<2x32xf32>
    %119 = arith.subf %118, %111 : vector<2x32xf32>
    %120 = arith.mulf %119, %117 : vector<2x32xf32>
    %121 = arith.mulf %111, %94 : vector<2x32xf32>
    %122 = arith.addf %120, %121 : vector<2x32xf32>
    %cst_27 = arith.constant dense<0.000000e+00> : vector<2x384xf32>
    %123 = tpu.matmul %122, %16, %cst_27 {dimension_numbers = #tpu.dot_dimension_numbers<[1], [0], [0], [1], [0, 0, 1, 1], [], []>} : vector<2x32xf32>, vector<32x384xf32>, vector<2x384xf32> -> vector<2x384xf32>
    %124 = vector.extract_strided_slice %13 {offsets = [8, 0], sizes = [2, 32], strides = [1, 1]} : vector<16x32xf32> to vector<2x32xf32>
    %125 = vector.extract_strided_slice %123 {offsets = [0, 0], sizes = [2, 32], strides = [1, 1]} : vector<2x384xf32> to vector<2x32xf32>
    %126 = arith.addf %124, %125 : vector<2x32xf32>
    %127 = arith.negf %126 : vector<2x32xf32>
    %128 = math.exp %127 : vector<2x32xf32>
    %cst_28 = arith.constant 1.000000e+00 : f32
    %129 = vector.broadcast %cst_28 : f32 to vector<2x32xf32>
    %130 = arith.addf %129, %128 : vector<2x32xf32>
    %131 = arith.divf %129, %130 : vector<2x32xf32>
    %132 = vector.extract_strided_slice %14 {offsets = [8, 0], sizes = [2, 32], strides = [1, 1]} : vector<16x32xf32> to vector<2x32xf32>
    %133 = vector.extract_strided_slice %123 {offsets = [0, 128], sizes = [2, 32], strides = [1, 1]} : vector<2x384xf32> to vector<2x32xf32>
    %134 = arith.addf %132, %133 : vector<2x32xf32>
    %135 = arith.negf %134 : vector<2x32xf32>
    %136 = math.exp %135 : vector<2x32xf32>
    %cst_29 = arith.constant 1.000000e+00 : f32
    %137 = vector.broadcast %cst_29 : f32 to vector<2x32xf32>
    %138 = arith.addf %137, %136 : vector<2x32xf32>
    %139 = arith.divf %137, %138 : vector<2x32xf32>
    %140 = vector.extract_strided_slice %15 {offsets = [8, 0], sizes = [2, 32], strides = [1, 1]} : vector<16x32xf32> to vector<2x32xf32>
    %141 = vector.extract_strided_slice %123 {offsets = [0, 256], sizes = [2, 32], strides = [1, 1]} : vector<2x384xf32> to vector<2x32xf32>
    %142 = arith.addf %141, %19 : vector<2x32xf32>
    %143 = arith.mulf %131, %142 : vector<2x32xf32>
    %144 = arith.addf %140, %143 : vector<2x32xf32>
    %145 = math.tanh %144 : vector<2x32xf32>
    %cst_30 = arith.constant 1.000000e+00 : f32
    %146 = vector.broadcast %cst_30 : f32 to vector<2x32xf32>
    %147 = arith.subf %146, %139 : vector<2x32xf32>
    %148 = arith.mulf %147, %145 : vector<2x32xf32>
    %149 = arith.mulf %139, %122 : vector<2x32xf32>
    %150 = arith.addf %148, %149 : vector<2x32xf32>
    %cst_31 = arith.constant dense<0.000000e+00> : vector<2x384xf32>
    %151 = tpu.matmul %150, %16, %cst_31 {dimension_numbers = #tpu.dot_dimension_numbers<[1], [0], [0], [1], [0, 0, 1, 1], [], []>} : vector<2x32xf32>, vector<32x384xf32>, vector<2x384xf32> -> vector<2x384xf32>
    %152 = vector.extract_strided_slice %13 {offsets = [10, 0], sizes = [2, 32], strides = [1, 1]} : vector<16x32xf32> to vector<2x32xf32>
    %153 = vector.extract_strided_slice %151 {offsets = [0, 0], sizes = [2, 32], strides = [1, 1]} : vector<2x384xf32> to vector<2x32xf32>
    %154 = arith.addf %152, %153 : vector<2x32xf32>
    %155 = arith.negf %154 : vector<2x32xf32>
    %156 = math.exp %155 : vector<2x32xf32>
    %cst_32 = arith.constant 1.000000e+00 : f32
    %157 = vector.broadcast %cst_32 : f32 to vector<2x32xf32>
    %158 = arith.addf %157, %156 : vector<2x32xf32>
    %159 = arith.divf %157, %158 : vector<2x32xf32>
    %160 = vector.extract_strided_slice %14 {offsets = [10, 0], sizes = [2, 32], strides = [1, 1]} : vector<16x32xf32> to vector<2x32xf32>
    %161 = vector.extract_strided_slice %151 {offsets = [0, 128], sizes = [2, 32], strides = [1, 1]} : vector<2x384xf32> to vector<2x32xf32>
    %162 = arith.addf %160, %161 : vector<2x32xf32>
    %163 = arith.negf %162 : vector<2x32xf32>
    %164 = math.exp %163 : vector<2x32xf32>
    %cst_33 = arith.constant 1.000000e+00 : f32
    %165 = vector.broadcast %cst_33 : f32 to vector<2x32xf32>
    %166 = arith.addf %165, %164 : vector<2x32xf32>
    %167 = arith.divf %165, %166 : vector<2x32xf32>
    %168 = vector.extract_strided_slice %15 {offsets = [10, 0], sizes = [2, 32], strides = [1, 1]} : vector<16x32xf32> to vector<2x32xf32>
    %169 = vector.extract_strided_slice %151 {offsets = [0, 256], sizes = [2, 32], strides = [1, 1]} : vector<2x384xf32> to vector<2x32xf32>
    %170 = arith.addf %169, %19 : vector<2x32xf32>
    %171 = arith.mulf %159, %170 : vector<2x32xf32>
    %172 = arith.addf %168, %171 : vector<2x32xf32>
    %173 = math.tanh %172 : vector<2x32xf32>
    %cst_34 = arith.constant 1.000000e+00 : f32
    %174 = vector.broadcast %cst_34 : f32 to vector<2x32xf32>
    %175 = arith.subf %174, %167 : vector<2x32xf32>
    %176 = arith.mulf %175, %173 : vector<2x32xf32>
    %177 = arith.mulf %167, %150 : vector<2x32xf32>
    %178 = arith.addf %176, %177 : vector<2x32xf32>
    %cst_35 = arith.constant dense<0.000000e+00> : vector<2x384xf32>
    %179 = tpu.matmul %178, %16, %cst_35 {dimension_numbers = #tpu.dot_dimension_numbers<[1], [0], [0], [1], [0, 0, 1, 1], [], []>} : vector<2x32xf32>, vector<32x384xf32>, vector<2x384xf32> -> vector<2x384xf32>
    %180 = vector.extract_strided_slice %13 {offsets = [12, 0], sizes = [2, 32], strides = [1, 1]} : vector<16x32xf32> to vector<2x32xf32>
    %181 = vector.extract_strided_slice %179 {offsets = [0, 0], sizes = [2, 32], strides = [1, 1]} : vector<2x384xf32> to vector<2x32xf32>
    %182 = arith.addf %180, %181 : vector<2x32xf32>
    %183 = arith.negf %182 : vector<2x32xf32>
    %184 = math.exp %183 : vector<2x32xf32>
    %cst_36 = arith.constant 1.000000e+00 : f32
    %185 = vector.broadcast %cst_36 : f32 to vector<2x32xf32>
    %186 = arith.addf %185, %184 : vector<2x32xf32>
    %187 = arith.divf %185, %186 : vector<2x32xf32>
    %188 = vector.extract_strided_slice %14 {offsets = [12, 0], sizes = [2, 32], strides = [1, 1]} : vector<16x32xf32> to vector<2x32xf32>
    %189 = vector.extract_strided_slice %179 {offsets = [0, 128], sizes = [2, 32], strides = [1, 1]} : vector<2x384xf32> to vector<2x32xf32>
    %190 = arith.addf %188, %189 : vector<2x32xf32>
    %191 = arith.negf %190 : vector<2x32xf32>
    %192 = math.exp %191 : vector<2x32xf32>
    %cst_37 = arith.constant 1.000000e+00 : f32
    %193 = vector.broadcast %cst_37 : f32 to vector<2x32xf32>
    %194 = arith.addf %193, %192 : vector<2x32xf32>
    %195 = arith.divf %193, %194 : vector<2x32xf32>
    %196 = vector.extract_strided_slice %15 {offsets = [12, 0], sizes = [2, 32], strides = [1, 1]} : vector<16x32xf32> to vector<2x32xf32>
    %197 = vector.extract_strided_slice %179 {offsets = [0, 256], sizes = [2, 32], strides = [1, 1]} : vector<2x384xf32> to vector<2x32xf32>
    %198 = arith.addf %197, %19 : vector<2x32xf32>
    %199 = arith.mulf %187, %198 : vector<2x32xf32>
    %200 = arith.addf %196, %199 : vector<2x32xf32>
    %201 = math.tanh %200 : vector<2x32xf32>
    %cst_38 = arith.constant 1.000000e+00 : f32
    %202 = vector.broadcast %cst_38 : f32 to vector<2x32xf32>
    %203 = arith.subf %202, %195 : vector<2x32xf32>
    %204 = arith.mulf %203, %201 : vector<2x32xf32>
    %205 = arith.mulf %195, %178 : vector<2x32xf32>
    %206 = arith.addf %204, %205 : vector<2x32xf32>
    %cst_39 = arith.constant dense<0.000000e+00> : vector<2x384xf32>
    %207 = tpu.matmul %206, %16, %cst_39 {dimension_numbers = #tpu.dot_dimension_numbers<[1], [0], [0], [1], [0, 0, 1, 1], [], []>} : vector<2x32xf32>, vector<32x384xf32>, vector<2x384xf32> -> vector<2x384xf32>
    %208 = vector.extract_strided_slice %13 {offsets = [14, 0], sizes = [2, 32], strides = [1, 1]} : vector<16x32xf32> to vector<2x32xf32>
    %209 = vector.extract_strided_slice %207 {offsets = [0, 0], sizes = [2, 32], strides = [1, 1]} : vector<2x384xf32> to vector<2x32xf32>
    %210 = arith.addf %208, %209 : vector<2x32xf32>
    %211 = arith.negf %210 : vector<2x32xf32>
    %212 = math.exp %211 : vector<2x32xf32>
    %cst_40 = arith.constant 1.000000e+00 : f32
    %213 = vector.broadcast %cst_40 : f32 to vector<2x32xf32>
    %214 = arith.addf %213, %212 : vector<2x32xf32>
    %215 = arith.divf %213, %214 : vector<2x32xf32>
    %216 = vector.extract_strided_slice %14 {offsets = [14, 0], sizes = [2, 32], strides = [1, 1]} : vector<16x32xf32> to vector<2x32xf32>
    %217 = vector.extract_strided_slice %207 {offsets = [0, 128], sizes = [2, 32], strides = [1, 1]} : vector<2x384xf32> to vector<2x32xf32>
    %218 = arith.addf %216, %217 : vector<2x32xf32>
    %219 = arith.negf %218 : vector<2x32xf32>
    %220 = math.exp %219 : vector<2x32xf32>
    %cst_41 = arith.constant 1.000000e+00 : f32
    %221 = vector.broadcast %cst_41 : f32 to vector<2x32xf32>
    %222 = arith.addf %221, %220 : vector<2x32xf32>
    %223 = arith.divf %221, %222 : vector<2x32xf32>
    %224 = vector.extract_strided_slice %15 {offsets = [14, 0], sizes = [2, 32], strides = [1, 1]} : vector<16x32xf32> to vector<2x32xf32>
    %225 = vector.extract_strided_slice %207 {offsets = [0, 256], sizes = [2, 32], strides = [1, 1]} : vector<2x384xf32> to vector<2x32xf32>
    %226 = arith.addf %225, %19 : vector<2x32xf32>
    %227 = arith.mulf %215, %226 : vector<2x32xf32>
    %228 = arith.addf %224, %227 : vector<2x32xf32>
    %229 = math.tanh %228 : vector<2x32xf32>
    %cst_42 = arith.constant 1.000000e+00 : f32
    %230 = vector.broadcast %cst_42 : f32 to vector<2x32xf32>
    %231 = arith.subf %230, %223 : vector<2x32xf32>
    %232 = arith.mulf %231, %229 : vector<2x32xf32>
    %233 = arith.mulf %223, %206 : vector<2x32xf32>
    %234 = arith.addf %232, %233 : vector<2x32xf32>
    %235 = tpu.concatenate %38, %66, %94, %122, %150, %178, %206, %234 in 0 : vector<2x32xf32>, vector<2x32xf32>, vector<2x32xf32>, vector<2x32xf32>, vector<2x32xf32>, vector<2x32xf32>, vector<2x32xf32>, vector<2x32xf32> -> vector<16x32xf32>
    %c0_43 = arith.constant 0 : index
    %c0_44 = arith.constant 0 : index
    %236 = vector.load %arg7[%c0_43, %c0_44] : memref<16x32xf32, #tpu.memory_space<vmem>>, vector<16x32xf32>
    tpu.vector_store %arg7[%c0_43, %c0_44], %235 {strides = array<i32>} : memref<16x32xf32, #tpu.memory_space<vmem>>, vector<16x32xf32>,
    %c0_45 = arith.constant 0 : index
    %c0_46 = arith.constant 0 : index
    %237 = vector.load %arg8[%c0_45, %c0_46] : memref<2x32xf32, #tpu.memory_space<vmem>>, vector<2x32xf32>
    tpu.vector_store %arg8[%c0_45, %c0_46], %234 {strides = array<i32>} : memref<2x32xf32, #tpu.memory_space<vmem>>, vector<2x32xf32>,
    return
  }
  func.func @transform_0(%arg0: i32) -> (i32, i32) {
    %c0_i32 = arith.constant 0 : i32
    %c0_i32_0 = arith.constant 0 : i32
    %c0_i32_1 = arith.constant 0 : i32
    return %c0_i32, %c0_i32_0 : i32, i32
  }
  func.func @transform_1(%arg0: i32) -> (i32, i32) {
    %c0_i32 = arith.constant 0 : i32
    %c0_i32_0 = arith.constant 0 : i32
    %c0_i32_1 = arith.constant 0 : i32
    return %c0_i32, %c0_i32_0 : i32, i32
  }
  func.func @transform_2(%arg0: i32) -> (i32, i32) {
    %c0_i32 = arith.constant 0 : i32
    %c0_i32_0 = arith.constant 0 : i32
    %c0_i32_1 = arith.constant 0 : i32
    return %c0_i32, %c0_i32_0 : i32, i32
  }
  func.func @transform_3(%arg0: i32) -> (i32, i32) {
    %c0_i32 = arith.constant 0 : i32
    %c0_i32_0 = arith.constant 0 : i32
    %c0_i32_1 = arith.constant 0 : i32
    return %c0_i32, %c0_i32_0 : i32, i32
  }
  func.func @transform_4(%arg0: i32) -> (i32, i32) {
    %c0_i32 = arith.constant 0 : i32
    %c0_i32_0 = arith.constant 0 : i32
    %c0_i32_1 = arith.constant 0 : i32
    return %c0_i32, %c0_i32_0 : i32, i32
  }
  func.func @transform_5(%arg0: i32) -> (i32, i32) {
    %c0_i32 = arith.constant 0 : i32
    %c0_i32_0 = arith.constant 0 : i32
    %c0_i32_1 = arith.constant 0 : i32
    return %c0_i32, %c0_i32_0 : i32, i32
  }
  func.func @transform_6(%arg0: i32) -> (i32, i32) {
    %c0_i32 = arith.constant 0 : i32
    %c0_i32_0 = arith.constant 0 : i32
    %c0_i32_1 = arith.constant 0 : i32
    return %c0_i32, %c0_i32_0 : i32, i32
  }
  func.func @transform_7(%arg0: i32) -> (i32, i32) {
    %c0_i32 = arith.constant 0 : i32
    %c0_i32_0 = arith.constant 0 : i32
    %c0_i32_1 = arith.constant 0 : i32
    return %c0_i32, %c0_i32_0 : i32, i32
  }
}

</mosaic_0001>

<llo_original>
// kernel: encoder_forward.1
$region0: #{encoder_forward.1}
  #allocation0 [shape = 'u32[]', space=smem, size = 0x4, offset = 0x4, fixed_abs, tag = 'smem constant byte address 0x4 - core index']
  #allocation1 [shape = 'u32[72,128]{1,0:T(1,128)}', space=vmem, size = 0x9000, scoped, tag = 'internal scratch']
  %s0 = inlined_call_operand.vmem [shape: s32[16,1], index: 0, kind: input, shape index: {}]
  %s1 = inlined_call_operand.vmem [shape: f32[50,32], index: 1, kind: input, shape index: {}]
  %s2 = inlined_call_operand.vmem [shape: f32[32,384], index: 2, kind: input, shape index: {}]
  %s3 = inlined_call_operand.vmem [shape: f32[32,384], index: 3, kind: input, shape index: {}]
  %s4 = inlined_call_operand.vmem [shape: f32[1,384], index: 4, kind: input, shape index: {}]
  %s5 = inlined_call_operand.vmem [shape: f32[1,32], index: 5, kind: input, shape index: {}]
  %s6 = inlined_call_operand.vmem [shape: f32[16,32], index: 6, kind: output, shape index: {0}]
  %s7 = inlined_call_operand.hbm [shape: f32[2,32], index: 7, kind: output, shape index: {1}]
  %8 = xla_tuple %s6, %s7
  %s9 = sld [smem:[#allocation0]]
  $region42: #{encoder_forward.1} parent=0
    _
  %s11 = ssub.s32 1, %s9
  %s12 = scalar_select 0, %s11, %s9
  $region1: #{encoder_forward.1} parent=0
    #allocation2 [shape = 'u8[1024]{0}', space=vmem, size = 0x400, scoped, tag = 'output window, operand 1, single buffered']
    #allocation3 [shape = 's32[1]{0}', space=sflag, size = 0x4, scoped, tag = 'scoped memory for encoder_forward.1']
    %13 = vsyncpa [#allocation3], 0
    // Predicated region
    $region2: #{encoder_forward.1} parent=1 // pred_check
      _
    $region3: #{encoder_forward.1} parent=1 // pred_check_branch
      %15 = sbr.rel (0) target = $region5
    $region4: #{encoder_forward.1} parent=1 // pred_region
      _
    $region5: #{encoder_forward.1} parent=1 // pred_fallthru
      _
    // Predicated region
    $region6: #{encoder_forward.1} parent=1 // pred_check
      _
    $region7: #{encoder_forward.1} parent=1 // pred_check_branch
      %17 = sbr.rel (0) target = $region9
    $region8: #{encoder_forward.1} parent=1 // pred_region
      _
    $region9: #{encoder_forward.1} parent=1 // pred_fallthru
      _
    // Predicated region
    $region10: #{encoder_forward.1} parent=1 // pred_check
      _
    $region11: #{encoder_forward.1} parent=1 // pred_check_branch
      %19 = sbr.rel (0) target = $region13
    $region12: #{encoder_forward.1} parent=1 // pred_region
      _
    $region13: #{encoder_forward.1} parent=1 // pred_fallthru
      _
    // Predicated region
    $region14: #{encoder_forward.1} parent=1 // pred_check
      _
    $region15: #{encoder_forward.1} parent=1 // pred_check_branch
      %21 = sbr.rel (0) target = $region17
    $region16: #{encoder_forward.1} parent=1 // pred_region
      _
    $region17: #{encoder_forward.1} parent=1 // pred_fallthru
      _
    // Predicated region
    $region18: #{encoder_forward.1} parent=1 // pred_check
      _
    $region19: #{encoder_forward.1} parent=1 // pred_check_branch
      %23 = sbr.rel (0) target = $region21
    $region20: #{encoder_forward.1} parent=1 // pred_region
      _
    $region21: #{encoder_forward.1} parent=1 // pred_fallthru
      _
    // Predicated region
    $region22: #{encoder_forward.1} parent=1 // pred_check
      _
    $region23: #{encoder_forward.1} parent=1 // pred_check_branch
      %25 = sbr.rel (0) target = $region25
    $region24: #{encoder_forward.1} parent=1 // pred_region
      _
    $region25: #{encoder_forward.1} parent=1 // pred_fallthru
      _
    %v26 = vld [vmem:[%s0] sm:$0xff]
    %v27 = vld [vmem:[%s0 + $0x8] sm:$0xff]
    %v28 = vlaneseq
    %v29 = vand.u32 %v28, 127
    %30 = vset.pattern.permute.xlu0 0
    %31 = vperm.xlu0 %30, %v26
    %v32 = vpop.permute.xlu0 %31
    %33 = vset.pattern.permute.xlu0 0
    %34 = vperm.xlu0 %33, %v27
    %v35 = vpop.permute.xlu0 %34
    %vm36 = vcmp.eq.s32.totalorder %v29, %v32
    %vm37 = vcmp.eq.s32.totalorder %v29, %v35
    %v38 = vsel %vm36, 1, 0
    %v39 = vsel %vm37, 1, 0
    %v40 = vcvt.s32.f32 %v38
    %v41 = vcvt.s32.f32 %v39
    %v42 = vld [vmem:[%s1] sm:$0xff]
    %v43 = vld [vmem:[%s1 + $0x8] sm:$0xff]
    %v44 = vld [vmem:[%s1 + $0x10] sm:$0xff]
    %v45 = vld [vmem:[%s1 + $0x18] sm:$0xff]
    %v46 = vld [vmem:[%s1 + $0x20] sm:$0xff]
    %v47 = vld [vmem:[%s1 + $0x28] sm:$0xff]
    %v48 = vld [vmem:[%s1 + $0x30] sm:$0x3]
    %vm49 = vcmask 408576
    %v51 = vsel %vm49, %v40, 0
    %v54 = vsel %vm49, %v41, 0
    %vm56 = vcmask 1041408
    %v58 = vsel %vm56, %v48, 0
    %60 = vmatpush.msra.mxu0 0.0
    %61 = vmatpush.msra.mxu0 0.0
    %62 = vmatpush.msra.mxu0 0.0
    %63 = vmatpush.msra.mxu0 0.0
    %64 = vmatpush.msra.mxu0 0.0
    %65 = vmatpush.msra.mxu0 0.0
    %66 = vmatpush.msra.mxu0 0.0
    %67 = vmatpush.msra.mxu0 0.0
    %68 = vmatpush.msra.mxu0 0.0
    %69 = vmatpush.msra.mxu0 %v58
    %70 = vmatpush.msra.mxu0 %v47
    %71 = vmatpush.msra.mxu0 %v46
    %72 = vmatpush.msra.mxu0 %v45
    %73 = vmatpush.msra.mxu0 %v44
    %74 = vmatpush.msra.mxu0 %v43
    %75 = vmatpush.msra.mxu0 %v42
    %76 = vmatmul.f32.gmra.mxu0 %v51
    %v77 = vpop.f32.mrf.mxu0
    %v78 = vadd.f32 0.0, %v77
    %79 = vmatmul.f32.gmra.mxu0 %v54
    %v80 = vpop.f32.mrf.mxu0
    %v81 = vadd.f32 0.0, %v80
    %82 = vdwg.mxu0
    %v83 = vld [vmem:[%s2] sm:$0xff]
    %v84 = vld [vmem:[%s2 + $0x8] sm:$0xff]
    %v85 = vld [vmem:[%s2 + $0x10] sm:$0xff]
    %v86 = vld [vmem:[%s2 + $0x18] sm:$0xff]
    %v87 = vld [vmem:[%s2 + $0x20] sm:$0xff]
    %v88 = vld [vmem:[%s2 + $0x28] sm:$0xff]
    %v89 = vld [vmem:[%s2 + $0x30] sm:$0xff]
    %v90 = vld [vmem:[%s2 + $0x38] sm:$0xff]
    %v91 = vld [vmem:[%s2 + $0x40] sm:$0xff]
    %v92 = vld [vmem:[%s2 + $0x48] sm:$0xff]
    %v93 = vld [vmem:[%s2 + $0x50] sm:$0xff]
    %v94 = vld [vmem:[%s2 + $0x58] sm:$0xff]
    %v95 = vld [vmem:[%s4] sm:$0x7]
    %v97 = vperm.slane %v95, 0
    %v98 = vperm.slane %v95, 1
    %v99 = vperm.slane %v95, 2
    %vm103 = vcmask 261120
    %v105 = vsel %vm103, %v78, 0
    %v108 = vsel %vm103, %v81, 0
    %110 = vmatpush.msra.mxu0 0.0
    %111 = vmatpush.msra.mxu0 0.0
    %112 = vmatpush.msra.mxu0 0.0
    %113 = vmatpush.msra.mxu0 0.0
    %114 = vmatpush.msra.mxu0 0.0
    %115 = vmatpush.msra.mxu0 0.0
    %116 = vmatpush.msra.mxu0 0.0
    %117 = vmatpush.msra.mxu0 0.0
    %118 = vmatpush.msra.mxu0 0.0
    %119 = vmatpush.msra.mxu0 0.0
    %120 = vmatpush.msra.mxu0 0.0
    %121 = vmatpush.msra.mxu0 0.0
    %122 = vmatpush.msra.mxu0 %v92
    %123 = vmatpush.msra.mxu0 %v89
    %124 = vmatpush.msra.mxu0 %v86
    %125 = vmatpush.msra.mxu0 %v83
    %126 = vmatmul.f32.gmra.mxu0 %v105
    %v127 = vpop.f32.mrf.mxu0
    %v128 = vadd.f32 %v97, %v127
    %129 = vmatmul.f32.gmra.mxu0 %v108
    %v130 = vpop.f32.mrf.mxu0
    %v131 = vadd.f32 %v97, %v130
    %132 = vdwg.mxu0
    %133 = vmatpush.msra.mxu0 0.0
    %134 = vmatpush.msra.mxu0 0.0
    %135 = vmatpush.msra.mxu0 0.0
    %136 = vmatpush.msra.mxu0 0.0
    %137 = vmatpush.msra.mxu0 0.0
    %138 = vmatpush.msra.mxu0 0.0
    %139 = vmatpush.msra.mxu0 0.0
    %140 = vmatpush.msra.mxu0 0.0
    %141 = vmatpush.msra.mxu0 0.0
    %142 = vmatpush.msra.mxu0 0.0
    %143 = vmatpush.msra.mxu0 0.0
    %144 = vmatpush.msra.mxu0 0.0
    %145 = vmatpush.msra.mxu0 %v93
    %146 = vmatpush.msra.mxu0 %v90
    %147 = vmatpush.msra.mxu0 %v87
    %148 = vmatpush.msra.mxu0 %v84
    %149 = vmatmul.f32.gmra.mxu0 %v105
    %v150 = vpop.f32.mrf.mxu0
    %v151 = vadd.f32 %v98, %v150
    %152 = vmatmul.f32.gmra.mxu0 %v108
    %v153 = vpop.f32.mrf.mxu0
    %v154 = vadd.f32 %v98, %v153
    %155 = vdwg.mxu0
    %156 = vmatpush.msra.mxu0 0.0
    %157 = vmatpush.msra.mxu0 0.0
    %158 = vmatpush.msra.mxu0 0.0
    %159 = vmatpush.msra.mxu0 0.0
    %160 = vmatpush.msra.mxu0 0.0
    %161 = vmatpush.msra.mxu0 0.0
    %162 = vmatpush.msra.mxu0 0.0
    %163 = vmatpush.msra.mxu0 0.0
    %164 = vmatpush.msra.mxu0 0.0
    %165 = vmatpush.msra.mxu0 0.0
    %166 = vmatpush.msra.mxu0 0.0
    %167 = vmatpush.msra.mxu0 0.0
    %168 = vmatpush.msra.mxu0 %v94
    %169 = vmatpush.msra.mxu0 %v91
    %170 = vmatpush.msra.mxu0 %v88
    %171 = vmatpush.msra.mxu0 %v85
    %172 = vmatmul.f32.gmra.mxu0 %v105
    %v173 = vpop.f32.mrf.mxu0
    %v174 = vadd.f32 %v99, %v173
    %175 = vmatmul.f32.gmra.mxu0 %v108
    %v176 = vpop.f32.mrf.mxu0
    %v177 = vadd.f32 %v99, %v176
    %178 = vdwg.mxu0
    %v179 = vld [vmem:[%s3] sm:$0xff]
    %v180 = vld [vmem:[%s3 + $0x8] sm:$0xff]
    %v181 = vld [vmem:[%s3 + $0x10] sm:$0xff]
    %v182 = vld [vmem:[%s3 + $0x18] sm:$0xff]
    %v183 = vld [vmem:[%s3 + $0x20] sm:$0xff]
    %v184 = vld [vmem:[%s3 + $0x28] sm:$0xff]
    %v185 = vld [vmem:[%s3 + $0x30] sm:$0xff]
    %v186 = vld [vmem:[%s3 + $0x38] sm:$0xff]
    %v187 = vld [vmem:[%s3 + $0x40] sm:$0xff]
    %v188 = vld [vmem:[%s3 + $0x48] sm:$0xff]
    %v189 = vld [vmem:[%s3 + $0x50] sm:$0xff]
    %v190 = vld [vmem:[%s3 + $0x58] sm:$0xff]
    %v191 = vld [vmem:[%s5] sm:$0x1]
    %v193 = vperm.slane %v191, 0
    %v195 = vxor.u32 %v128, 2147483648
    %v196 = vmul.f32 %v195, 1.442695
    %v197 = vpow.pop %v196
    %v198 = vadd.f32 %v197, 1.0
    %v199 = vrcp.pop %v198
    %v200 = vmul.f32 %v198, %v199
    %v201 = vsub.f32 1.0, %v200
    %v202 = vmul.f32 %v199, %v201
    %v203 = vadd.f32 %v199, %v202
    %vm204 = vweird.f32 %v198
    %vm205 = vweird.f32 %v199
    %vm206 = vmor %vm204, %vm205
    %v207 = vsel %vm206, %v199, %v203
    %v208 = vand.u32 2147483647, %v198
    %vm209 = vcmp.eq.f32.partialorder %v208, 8.507059e+37
    %v210 = vand.u32 %v198, 2147483648
    %v211 = vor.u32 1.1754944e-38, %v210
    %v212 = vsel %vm209, %v211, %v207
    %v213 = vmul.f32 1.0, %v212
    %v214 = vxor.u32 %v151, 2147483648
    %v215 = vmul.f32 %v214, 1.442695
    %v216 = vpow.pop %v215
    %v217 = vadd.f32 %v216, 1.0
    %v218 = vrcp.pop %v217
    %v219 = vmul.f32 %v217, %v218
    %v220 = vsub.f32 1.0, %v219
    %v221 = vmul.f32 %v218, %v220
    %v222 = vadd.f32 %v218, %v221
    %vm223 = vweird.f32 %v217
    %vm224 = vweird.f32 %v218
    %vm225 = vmor %vm223, %vm224
    %v226 = vsel %vm225, %v218, %v222
    %v227 = vand.u32 2147483647, %v217
    %vm228 = vcmp.eq.f32.partialorder %v227, 8.507059e+37
    %v229 = vand.u32 %v217, 2147483648
    %v230 = vor.u32 1.1754944e-38, %v229
    %v231 = vsel %vm228, %v230, %v226
    %v232 = vmul.f32 1.0, %v231
    %v233 = vmul.f32 %v213, %v193
    %v234 = vadd.f32 %v174, %v233
    %v235 = vtanh.pop %v234
    %v236 = vsub.f32 1.0, %v232
    %v237 = vmul.f32 %v236, %v235
    %v239 = vsel %vm103, %v237, 0
    %241 = vmatpush.msra.mxu0 0.0
    %242 = vmatpush.msra.mxu0 0.0
    %243 = vmatpush.msra.mxu0 0.0
    %244 = vmatpush.msra.mxu0 0.0
    %245 = vmatpush.msra.mxu0 0.0
    %246 = vmatpush.msra.mxu0 0.0
    %247 = vmatpush.msra.mxu0 0.0
    %248 = vmatpush.msra.mxu0 0.0
    %249 = vmatpush.msra.mxu0 0.0
    %250 = vmatpush.msra.mxu0 0.0
    %251 = vmatpush.msra.mxu0 0.0
    %252 = vmatpush.msra.mxu0 0.0
    %253 = vmatpush.msra.mxu0 %v188
    %254 = vmatpush.msra.mxu0 %v185
    %255 = vmatpush.msra.mxu0 %v182
    %256 = vmatpush.msra.mxu0 %v179
    %257 = vmatmul.f32.gmra.mxu0 %v239
    %v258 = vpop.f32.mrf.mxu0
    %v259 = vadd.f32 0.0, %v258
    %260 = vdwg.mxu0
    %261 = vmatpush.msra.mxu0 0.0
    %262 = vmatpush.msra.mxu0 0.0
    %263 = vmatpush.msra.mxu0 0.0
    %264 = vmatpush.msra.mxu0 0.0
    %265 = vmatpush.msra.mxu0 0.0
    %266 = vmatpush.msra.mxu0 0.0
    %267 = vmatpush.msra.mxu0 0.0
    %268 = vmatpush.msra.mxu0 0.0
    %269 = vmatpush.msra.mxu0 0.0
    %270 = vmatpush.msra.mxu0 0.0
    %271 = vmatpush.msra.mxu0 0.0
    %272 = vmatpush.msra.mxu0 0.0
    %273 = vmatpush.msra.mxu0 %v189
    %274 = vmatpush.msra.mxu0 %v186
    %275 = vmatpush.msra.mxu0 %v183
    %276 = vmatpush.msra.mxu0 %v180
    %277 = vmatmul.f32.gmra.mxu0 %v239
    %v278 = vpop.f32.mrf.mxu0
    %v279 = vadd.f32 0.0, %v278
    %280 = vdwg.mxu0
    %281 = vmatpush.msra.mxu0 0.0
    %282 = vmatpush.msra.mxu0 0.0
    %283 = vmatpush.msra.mxu0 0.0
    %284 = vmatpush.msra.mxu0 0.0
    %285 = vmatpush.msra.mxu0 0.0
    %286 = vmatpush.msra.mxu0 0.0
    %287 = vmatpush.msra.mxu0 0.0
    %288 = vmatpush.msra.mxu0 0.0
    %289 = vmatpush.msra.mxu0 0.0
    %290 = vmatpush.msra.mxu0 0.0
    %291 = vmatpush.msra.mxu0 0.0
    %292 = vmatpush.msra.mxu0 0.0
    %293 = vmatpush.msra.mxu0 %v190
    %294 = vmatpush.msra.mxu0 %v187
    %295 = vmatpush.msra.mxu0 %v184
    %296 = vmatpush.msra.mxu0 %v181
    %297 = vmatmul.f32.gmra.mxu0 %v239
    %v298 = vpop.f32.mrf.mxu0
    %v299 = vadd.f32 0.0, %v298
    %300 = vdwg.mxu0
    %v302 = vrot.slane %v259, 6
    %v304 = vadd.f32 %v128, %v302
    %v305 = vxor.u32 %v304, 2147483648
    %v306 = vmul.f32 %v305, 1.442695
    %v307 = vpow.pop %v306
    %v308 = vadd.f32 %v307, 1.0
    %v309 = vrcp.pop %v308
    %v310 = vmul.f32 %v308, %v309
    %v311 = vsub.f32 1.0, %v310
    %v312 = vmul.f32 %v309, %v311
    %v313 = vadd.f32 %v309, %v312
    %vm314 = vweird.f32 %v308
    %vm315 = vweird.f32 %v309
    %vm316 = vmor %vm314, %vm315
    %v317 = vsel %vm316, %v309, %v313
    %v318 = vand.u32 2147483647, %v308
    %vm319 = vcmp.eq.f32.partialorder %v318, 8.507059e+37
    %v320 = vand.u32 %v308, 2147483648
    %v321 = vor.u32 1.1754944e-38, %v320
    %v322 = vsel %vm319, %v321, %v317
    %v323 = vmul.f32 1.0, %v322
    %v325 = vrot.slane %v279, 6
    %v327 = vadd.f32 %v151, %v325
    %v328 = vxor.u32 %v327, 2147483648
    %v329 = vmul.f32 %v328, 1.442695
    %v330 = vpow.pop %v329
    %v331 = vadd.f32 %v330, 1.0
    %v332 = vrcp.pop %v331
    %v333 = vmul.f32 %v331, %v332
    %v334 = vsub.f32 1.0, %v333
    %v335 = vmul.f32 %v332, %v334
    %v336 = vadd.f32 %v332, %v335
    %vm337 = vweird.f32 %v331
    %vm338 = vweird.f32 %v332
    %vm339 = vmor %vm337, %vm338
    %v340 = vsel %vm339, %v332, %v336
    %v341 = vand.u32 2147483647, %v331
    %vm342 = vcmp.eq.f32.partialorder %v341, 8.507059e+37
    %v343 = vand.u32 %v331, 2147483648
    %v344 = vor.u32 1.1754944e-38, %v343
    %v345 = vsel %vm342, %v344, %v340
    %v346 = vmul.f32 1.0, %v345
    %v347 = vadd.f32 %v299, %v193
    %v349 = vrot.slane %v347, 6
    %v351 = vmul.f32 %v323, %v349
    %v352 = vadd.f32 %v174, %v351
    %v353 = vtanh.pop %v352
    %v354 = vsub.f32 1.0, %v346
    %v355 = vmul.f32 %v354, %v353
    %v356 = vrot.slane %v237, 6
    %v358 = vmul.f32 %v346, %v356
    %v359 = vadd.f32 %v355, %v358
    %v361 = vrot.slane %v359, 2
    %v362 = vsel %vm103, %v361, 0
    %364 = vmatpush.msra.mxu0 0.0
    %365 = vmatpush.msra.mxu0 0.0
    %366 = vmatpush.msra.mxu0 0.0
    %367 = vmatpush.msra.mxu0 0.0
    %368 = vmatpush.msra.mxu0 0.0
    %369 = vmatpush.msra.mxu0 0.0
    %370 = vmatpush.msra.mxu0 0.0
    %371 = vmatpush.msra.mxu0 0.0
    %372 = vmatpush.msra.mxu0 0.0
    %373 = vmatpush.msra.mxu0 0.0
    %374 = vmatpush.msra.mxu0 0.0
    %375 = vmatpush.msra.mxu0 0.0
    %376 = vmatpush.msra.mxu0 %v188
    %377 = vmatpush.msra.mxu0 %v185
    %378 = vmatpush.msra.mxu0 %v182
    %379 = vmatpush.msra.mxu0 %v179
    %380 = vmatmul.f32.gmra.mxu0 %v362
    %v381 = vpop.f32.mrf.mxu0
    %v382 = vadd.f32 0.0, %v381
    %383 = vdwg.mxu0
    %384 = vmatpush.msra.mxu0 0.0
    %385 = vmatpush.msra.mxu0 0.0
    %386 = vmatpush.msra.mxu0 0.0
    %387 = vmatpush.msra.mxu0 0.0
    %388 = vmatpush.msra.mxu0 0.0
    %389 = vmatpush.msra.mxu0 0.0
    %390 = vmatpush.msra.mxu0 0.0
    %391 = vmatpush.msra.mxu0 0.0
    %392 = vmatpush.msra.mxu0 0.0
    %393 = vmatpush.msra.mxu0 0.0
    %394 = vmatpush.msra.mxu0 0.0
    %395 = vmatpush.msra.mxu0 0.0
    %396 = vmatpush.msra.mxu0 %v189
    %397 = vmatpush.msra.mxu0 %v186
    %398 = vmatpush.msra.mxu0 %v183
    %399 = vmatpush.msra.mxu0 %v180
    %400 = vmatmul.f32.gmra.mxu0 %v362
    %v401 = vpop.f32.mrf.mxu0
    %v402 = vadd.f32 0.0, %v401
    %403 = vdwg.mxu0
    %404 = vmatpush.msra.mxu0 0.0
    %405 = vmatpush.msra.mxu0 0.0
    %406 = vmatpush.msra.mxu0 0.0
    %407 = vmatpush.msra.mxu0 0.0
    %408 = vmatpush.msra.mxu0 0.0
    %409 = vmatpush.msra.mxu0 0.0
    %410 = vmatpush.msra.mxu0 0.0
    %411 = vmatpush.msra.mxu0 0.0
    %412 = vmatpush.msra.mxu0 0.0
    %413 = vmatpush.msra.mxu0 0.0
    %414 = vmatpush.msra.mxu0 0.0
    %415 = vmatpush.msra.mxu0 0.0
    %416 = vmatpush.msra.mxu0 %v190
    %417 = vmatpush.msra.mxu0 %v187
    %418 = vmatpush.msra.mxu0 %v184
    %419 = vmatpush.msra.mxu0 %v181
    %420 = vmatmul.f32.gmra.mxu0 %v362
    %v421 = vpop.f32.mrf.mxu0
    %v422 = vadd.f32 0.0, %v421
    %423 = vdwg.mxu0
    %v425 = vrot.slane %v382, 4
    %v427 = vadd.f32 %v128, %v425
    %v428 = vxor.u32 %v427, 2147483648
    %v429 = vmul.f32 %v428, 1.442695
    %v430 = vpow.pop %v429
    %v431 = vadd.f32 %v430, 1.0
    %v432 = vrcp.pop %v431
    %v433 = vmul.f32 %v431, %v432
    %v434 = vsub.f32 1.0, %v433
    %v435 = vmul.f32 %v432, %v434
    %v436 = vadd.f32 %v432, %v435
    %vm437 = vweird.f32 %v431
    %vm438 = vweird.f32 %v432
    %vm439 = vmor %vm437, %vm438
    %v440 = vsel %vm439, %v432, %v436
    %v441 = vand.u32 2147483647, %v431
    %vm442 = vcmp.eq.f32.partialorder %v441, 8.507059e+37
    %v443 = vand.u32 %v431, 2147483648
    %v444 = vor.u32 1.1754944e-38, %v443
    %v445 = vsel %vm442, %v444, %v440
    %v446 = vmul.f32 1.0, %v445
    %v448 = vrot.slane %v402, 4
    %v450 = vadd.f32 %v151, %v448
    %v451 = vxor.u32 %v450, 2147483648
    %v452 = vmul.f32 %v451, 1.442695
    %v453 = vpow.pop %v452
    %v454 = vadd.f32 %v453, 1.0
    %v455 = vrcp.pop %v454
    %v456 = vmul.f32 %v454, %v455
    %v457 = vsub.f32 1.0, %v456
    %v458 = vmul.f32 %v455, %v457
    %v459 = vadd.f32 %v455, %v458
    %vm460 = vweird.f32 %v454
    %vm461 = vweird.f32 %v455
    %vm462 = vmor %vm460, %vm461
    %v463 = vsel %vm462, %v455, %v459
    %v464 = vand.u32 2147483647, %v454
    %vm465 = vcmp.eq.f32.partialorder %v464, 8.507059e+37
    %v466 = vand.u32 %v454, 2147483648
    %v467 = vor.u32 1.1754944e-38, %v466
    %v468 = vsel %vm465, %v467, %v463
    %v469 = vmul.f32 1.0, %v468
    %v470 = vadd.f32 %v422, %v193
    %v472 = vrot.slane %v470, 4
    %v474 = vmul.f32 %v446, %v472
    %v475 = vadd.f32 %v174, %v474
    %v476 = vtanh.pop %v475
    %v477 = vsub.f32 1.0, %v469
    %v478 = vmul.f32 %v477, %v476
    %v479 = vrot.slane %v359, 6
    %v481 = vmul.f32 %v469, %v479
    %v482 = vadd.f32 %v478, %v481
    %v484 = vrot.slane %v482, 4
    %v485 = vsel %vm103, %v484, 0
    %487 = vmatpush.msra.mxu0 0.0
    %488 = vmatpush.msra.mxu0 0.0
    %489 = vmatpush.msra.mxu0 0.0
    %490 = vmatpush.msra.mxu0 0.0
    %491 = vmatpush.msra.mxu0 0.0
    %492 = vmatpush.msra.mxu0 0.0
    %493 = vmatpush.msra.mxu0 0.0
    %494 = vmatpush.msra.mxu0 0.0
    %495 = vmatpush.msra.mxu0 0.0
    %496 = vmatpush.msra.mxu0 0.0
    %497 = vmatpush.msra.mxu0 0.0
    %498 = vmatpush.msra.mxu0 0.0
    %499 = vmatpush.msra.mxu0 %v188
    %500 = vmatpush.msra.mxu0 %v185
    %501 = vmatpush.msra.mxu0 %v182
    %502 = vmatpush.msra.mxu0 %v179
    %503 = vmatmul.f32.gmra.mxu0 %v485
    %v504 = vpop.f32.mrf.mxu0
    %v505 = vadd.f32 0.0, %v504
    %506 = vdwg.mxu0
    %507 = vmatpush.msra.mxu0 0.0
    %508 = vmatpush.msra.mxu0 0.0
    %509 = vmatpush.msra.mxu0 0.0
    %510 = vmatpush.msra.mxu0 0.0
    %511 = vmatpush.msra.mxu0 0.0
    %512 = vmatpush.msra.mxu0 0.0
    %513 = vmatpush.msra.mxu0 0.0
    %514 = vmatpush.msra.mxu0 0.0
    %515 = vmatpush.msra.mxu0 0.0
    %516 = vmatpush.msra.mxu0 0.0
    %517 = vmatpush.msra.mxu0 0.0
    %518 = vmatpush.msra.mxu0 0.0
    %519 = vmatpush.msra.mxu0 %v189
    %520 = vmatpush.msra.mxu0 %v186
    %521 = vmatpush.msra.mxu0 %v183
    %522 = vmatpush.msra.mxu0 %v180
    %523 = vmatmul.f32.gmra.mxu0 %v485
    %v524 = vpop.f32.mrf.mxu0
    %v525 = vadd.f32 0.0, %v524
    %526 = vdwg.mxu0
    %527 = vmatpush.msra.mxu0 0.0
    %528 = vmatpush.msra.mxu0 0.0
    %529 = vmatpush.msra.mxu0 0.0
    %530 = vmatpush.msra.mxu0 0.0
    %531 = vmatpush.msra.mxu0 0.0
    %532 = vmatpush.msra.mxu0 0.0
    %533 = vmatpush.msra.mxu0 0.0
    %534 = vmatpush.msra.mxu0 0.0
    %535 = vmatpush.msra.mxu0 0.0
    %536 = vmatpush.msra.mxu0 0.0
    %537 = vmatpush.msra.mxu0 0.0
    %538 = vmatpush.msra.mxu0 0.0
    %539 = vmatpush.msra.mxu0 %v190
    %540 = vmatpush.msra.mxu0 %v187
    %541 = vmatpush.msra.mxu0 %v184
    %542 = vmatpush.msra.mxu0 %v181
    %543 = vmatmul.f32.gmra.mxu0 %v485
    %v544 = vpop.f32.mrf.mxu0
    %v545 = vadd.f32 0.0, %v544
    %546 = vdwg.mxu0
    %v548 = vrot.slane %v505, 2
    %v550 = vadd.f32 %v128, %v548
    %v551 = vxor.u32 %v550, 2147483648
    %v552 = vmul.f32 %v551, 1.442695
    %v553 = vpow.pop %v552
    %v554 = vadd.f32 %v553, 1.0
    %v555 = vrcp.pop %v554
    %v556 = vmul.f32 %v554, %v555
    %v557 = vsub.f32 1.0, %v556
    %v558 = vmul.f32 %v555, %v557
    %v559 = vadd.f32 %v555, %v558
    %vm560 = vweird.f32 %v554
    %vm561 = vweird.f32 %v555
    %vm562 = vmor %vm560, %vm561
    %v563 = vsel %vm562, %v555, %v559
    %v564 = vand.u32 2147483647, %v554
    %vm565 = vcmp.eq.f32.partialorder %v564, 8.507059e+37
    %v566 = vand.u32 %v554, 2147483648
    %v567 = vor.u32 1.1754944e-38, %v566
    %v568 = vsel %vm565, %v567, %v563
    %v569 = vmul.f32 1.0, %v568
    %v571 = vrot.slane %v525, 2
    %v573 = vadd.f32 %v151, %v571
    %v574 = vxor.u32 %v573, 2147483648
    %v575 = vmul.f32 %v574, 1.442695
    %v576 = vpow.pop %v575
    %v577 = vadd.f32 %v576, 1.0
    %v578 = vrcp.pop %v577
    %v579 = vmul.f32 %v577, %v578
    %v580 = vsub.f32 1.0, %v579
    %v581 = vmul.f32 %v578, %v580
    %v582 = vadd.f32 %v578, %v581
    %vm583 = vweird.f32 %v577
    %vm584 = vweird.f32 %v578
    %vm585 = vmor %vm583, %vm584
    %v586 = vsel %vm585, %v578, %v582
    %v587 = vand.u32 2147483647, %v577
    %vm588 = vcmp.eq.f32.partialorder %v587, 8.507059e+37
    %v589 = vand.u32 %v577, 2147483648
    %v590 = vor.u32 1.1754944e-38, %v589
    %v591 = vsel %vm588, %v590, %v586
    %v592 = vmul.f32 1.0, %v591
    %v593 = vadd.f32 %v545, %v193
    %v595 = vrot.slane %v593, 2
    %v597 = vmul.f32 %v569, %v595
    %v598 = vadd.f32 %v174, %v597
    %v599 = vtanh.pop %v598
    %v600 = vsub.f32 1.0, %v592
    %v601 = vmul.f32 %v600, %v599
    %v602 = vrot.slane %v482, 6
    %v604 = vmul.f32 %v592, %v602
    %v605 = vadd.f32 %v601, %v604
    %v607 = vrot.slane %v605, 6
    %v608 = vsel %vm103, %v607, 0
    %610 = vmatpush.msra.mxu0 0.0
    %611 = vmatpush.msra.mxu0 0.0
    %612 = vmatpush.msra.mxu0 0.0
    %613 = vmatpush.msra.mxu0 0.0
    %614 = vmatpush.msra.mxu0 0.0
    %615 = vmatpush.msra.mxu0 0.0
    %616 = vmatpush.msra.mxu0 0.0
    %617 = vmatpush.msra.mxu0 0.0
    %618 = vmatpush.msra.mxu0 0.0
    %619 = vmatpush.msra.mxu0 0.0
    %620 = vmatpush.msra.mxu0 0.0
    %621 = vmatpush.msra.mxu0 0.0
    %622 = vmatpush.msra.mxu0 %v188
    %623 = vmatpush.msra.mxu0 %v185
    %624 = vmatpush.msra.mxu0 %v182
    %625 = vmatpush.msra.mxu0 %v179
    %626 = vmatmul.f32.gmra.mxu0 %v608
    %v627 = vpop.f32.mrf.mxu0
    %v628 = vadd.f32 0.0, %v627
    %629 = vdwg.mxu0
    %630 = vmatpush.msra.mxu0 0.0
    %631 = vmatpush.msra.mxu0 0.0
    %632 = vmatpush.msra.mxu0 0.0
    %633 = vmatpush.msra.mxu0 0.0
    %634 = vmatpush.msra.mxu0 0.0
    %635 = vmatpush.msra.mxu0 0.0
    %636 = vmatpush.msra.mxu0 0.0
    %637 = vmatpush.msra.mxu0 0.0
    %638 = vmatpush.msra.mxu0 0.0
    %639 = vmatpush.msra.mxu0 0.0
    %640 = vmatpush.msra.mxu0 0.0
    %641 = vmatpush.msra.mxu0 0.0
    %642 = vmatpush.msra.mxu0 %v189
    %643 = vmatpush.msra.mxu0 %v186
    %644 = vmatpush.msra.mxu0 %v183
    %645 = vmatpush.msra.mxu0 %v180
    %646 = vmatmul.f32.gmra.mxu0 %v608
    %v647 = vpop.f32.mrf.mxu0
    %v648 = vadd.f32 0.0, %v647
    %649 = vdwg.mxu0
    %650 = vmatpush.msra.mxu0 0.0
    %651 = vmatpush.msra.mxu0 0.0
    %652 = vmatpush.msra.mxu0 0.0
    %653 = vmatpush.msra.mxu0 0.0
    %654 = vmatpush.msra.mxu0 0.0
    %655 = vmatpush.msra.mxu0 0.0
    %656 = vmatpush.msra.mxu0 0.0
    %657 = vmatpush.msra.mxu0 0.0
    %658 = vmatpush.msra.mxu0 0.0
    %659 = vmatpush.msra.mxu0 0.0
    %660 = vmatpush.msra.mxu0 0.0
    %661 = vmatpush.msra.mxu0 0.0
    %662 = vmatpush.msra.mxu0 %v190
    %663 = vmatpush.msra.mxu0 %v187
    %664 = vmatpush.msra.mxu0 %v184
    %665 = vmatpush.msra.mxu0 %v181
    %666 = vmatmul.f32.gmra.mxu0 %v608
    %v667 = vpop.f32.mrf.mxu0
    %v668 = vadd.f32 0.0, %v667
    %669 = vdwg.mxu0
    %v670 = vadd.f32 %v131, %v628
    %v671 = vxor.u32 %v670, 2147483648
    %v672 = vmul.f32 %v671, 1.442695
    %v673 = vpow.pop %v672
    %v674 = vadd.f32 %v673, 1.0
    %v675 = vrcp.pop %v674
    %v676 = vmul.f32 %v674, %v675
    %v677 = vsub.f32 1.0, %v676
    %v678 = vmul.f32 %v675, %v677
    %v679 = vadd.f32 %v675, %v678
    %vm680 = vweird.f32 %v674
    %vm681 = vweird.f32 %v675
    %vm682 = vmor %vm680, %vm681
    %v683 = vsel %vm682, %v675, %v679
    %v684 = vand.u32 2147483647, %v674
    %vm685 = vcmp.eq.f32.partialorder %v684, 8.507059e+37
    %v686 = vand.u32 %v674, 2147483648
    %v687 = vor.u32 1.1754944e-38, %v686
    %v688 = vsel %vm685, %v687, %v683
    %v689 = vmul.f32 1.0, %v688
    %v690 = vadd.f32 %v154, %v648
    %v691 = vxor.u32 %v690, 2147483648
    %v692 = vmul.f32 %v691, 1.442695
    %v693 = vpow.pop %v692
    %v694 = vadd.f32 %v693, 1.0
    %v695 = vrcp.pop %v694
    %v696 = vmul.f32 %v694, %v695
    %v697 = vsub.f32 1.0, %v696
    %v698 = vmul.f32 %v695, %v697
    %v699 = vadd.f32 %v695, %v698
    %vm700 = vweird.f32 %v694
    %vm701 = vweird.f32 %v695
    %vm702 = vmor %vm700, %vm701
    %v703 = vsel %vm702, %v695, %v699
    %v704 = vand.u32 2147483647, %v694
    %vm705 = vcmp.eq.f32.partialorder %v704, 8.507059e+37
    %v706 = vand.u32 %v694, 2147483648
    %v707 = vor.u32 1.1754944e-38, %v706
    %v708 = vsel %vm705, %v707, %v703
    %v709 = vmul.f32 1.0, %v708
    %v710 = vadd.f32 %v668, %v193
    %v711 = vmul.f32 %v689, %v710
    %v712 = vadd.f32 %v177, %v711
    %v713 = vtanh.pop %v712
    %v714 = vsub.f32 1.0, %v709
    %v715 = vmul.f32 %v714, %v713
    %v717 = vmul.f32 %v709, %v607
    %v718 = vadd.f32 %v715, %v717
    %v720 = vsel %vm103, %v718, 0
    %722 = vmatpush.msra.mxu0 0.0
    %723 = vmatpush.msra.mxu0 0.0
    %724 = vmatpush.msra.mxu0 0.0
    %725 = vmatpush.msra.mxu0 0.0
    %726 = vmatpush.msra.mxu0 0.0
    %727 = vmatpush.msra.mxu0 0.0
    %728 = vmatpush.msra.mxu0 0.0
    %729 = vmatpush.msra.mxu0 0.0
    %730 = vmatpush.msra.mxu0 0.0
    %731 = vmatpush.msra.mxu0 0.0
    %732 = vmatpush.msra.mxu0 0.0
    %733 = vmatpush.msra.mxu0 0.0
    %734 = vmatpush.msra.mxu0 %v188
    %735 = vmatpush.msra.mxu0 %v185
    %736 = vmatpush.msra.mxu0 %v182
    %737 = vmatpush.msra.mxu0 %v179
    %738 = vmatmul.f32.gmra.mxu0 %v720
    %v739 = vpop.f32.mrf.mxu0
    %v740 = vadd.f32 0.0, %v739
    %741 = vdwg.mxu0
    %742 = vmatpush.msra.mxu0 0.0
    %743 = vmatpush.msra.mxu0 0.0
    %744 = vmatpush.msra.mxu0 0.0
    %745 = vmatpush.msra.mxu0 0.0
    %746 = vmatpush.msra.mxu0 0.0
    %747 = vmatpush.msra.mxu0 0.0
    %748 = vmatpush.msra.mxu0 0.0
    %749 = vmatpush.msra.mxu0 0.0
    %750 = vmatpush.msra.mxu0 0.0
    %751 = vmatpush.msra.mxu0 0.0
    %752 = vmatpush.msra.mxu0 0.0
    %753 = vmatpush.msra.mxu0 0.0
    %754 = vmatpush.msra.mxu0 %v189
    %755 = vmatpush.msra.mxu0 %v186
    %756 = vmatpush.msra.mxu0 %v183
    %757 = vmatpush.msra.mxu0 %v180
    %758 = vmatmul.f32.gmra.mxu0 %v720
    %v759 = vpop.f32.mrf.mxu0
    %v760 = vadd.f32 0.0, %v759
    %761 = vdwg.mxu0
    %762 = vmatpush.msra.mxu0 0.0
    %763 = vmatpush.msra.mxu0 0.0
    %764 = vmatpush.msra.mxu0 0.0
    %765 = vmatpush.msra.mxu0 0.0
    %766 = vmatpush.msra.mxu0 0.0
    %767 = vmatpush.msra.mxu0 0.0
    %768 = vmatpush.msra.mxu0 0.0
    %769 = vmatpush.msra.mxu0 0.0
    %770 = vmatpush.msra.mxu0 0.0
    %771 = vmatpush.msra.mxu0 0.0
    %772 = vmatpush.msra.mxu0 0.0
    %773 = vmatpush.msra.mxu0 0.0
    %774 = vmatpush.msra.mxu0 %v190
    %775 = vmatpush.msra.mxu0 %v187
    %776 = vmatpush.msra.mxu0 %v184
    %777 = vmatpush.msra.mxu0 %v181
    %778 = vmatmul.f32.gmra.mxu0 %v720
    %v779 = vpop.f32.mrf.mxu0
    %v780 = vadd.f32 0.0, %v779
    %781 = vdwg.mxu0
    %v783 = vrot.slane %v740, 6
    %v785 = vadd.f32 %v131, %v783
    %v786 = vxor.u32 %v785, 2147483648
    %v787 = vmul.f32 %v786, 1.442695
    %v788 = vpow.pop %v787
    %v789 = vadd.f32 %v788, 1.0
    %v790 = vrcp.pop %v789
    %v791 = vmul.f32 %v789, %v790
    %v792 = vsub.f32 1.0, %v791
    %v793 = vmul.f32 %v790, %v792
    %v794 = vadd.f32 %v790, %v793
    %vm795 = vweird.f32 %v789
    %vm796 = vweird.f32 %v790
    %vm797 = vmor %vm795, %vm796
    %v798 = vsel %vm797, %v790, %v794
    %v799 = vand.u32 2147483647, %v789
    %vm800 = vcmp.eq.f32.partialorder %v799, 8.507059e+37
    %v801 = vand.u32 %v789, 2147483648
    %v802 = vor.u32 1.1754944e-38, %v801
    %v803 = vsel %vm800, %v802, %v798
    %v804 = vmul.f32 1.0, %v803
    %v806 = vrot.slane %v760, 6
    %v808 = vadd.f32 %v154, %v806
    %v809 = vxor.u32 %v808, 2147483648
    %v810 = vmul.f32 %v809, 1.442695
    %v811 = vpow.pop %v810
    %v812 = vadd.f32 %v811, 1.0
    %v813 = vrcp.pop %v812
    %v814 = vmul.f32 %v812, %v813
    %v815 = vsub.f32 1.0, %v814
    %v816 = vmul.f32 %v813, %v815
    %v817 = vadd.f32 %v813, %v816
    %vm818 = vweird.f32 %v812
    %vm819 = vweird.f32 %v813
    %vm820 = vmor %vm818, %vm819
    %v821 = vsel %vm820, %v813, %v817
    %v822 = vand.u32 2147483647, %v812
    %vm823 = vcmp.eq.f32.partialorder %v822, 8.507059e+37
    %v824 = vand.u32 %v812, 2147483648
    %v825 = vor.u32 1.1754944e-38, %v824
    %v826 = vsel %vm823, %v825, %v821
    %v827 = vmul.f32 1.0, %v826
    %v828 = vadd.f32 %v780, %v193
    %v830 = vrot.slane %v828, 6
    %v832 = vmul.f32 %v804, %v830
    %v833 = vadd.f32 %v177, %v832
    %v834 = vtanh.pop %v833
    %v835 = vsub.f32 1.0, %v827
    %v836 = vmul.f32 %v835, %v834
    %v837 = vrot.slane %v718, 6
    %v839 = vmul.f32 %v827, %v837
    %v840 = vadd.f32 %v836, %v839
    %v842 = vrot.slane %v840, 2
    %v843 = vsel %vm103, %v842, 0
    %845 = vmatpush.msra.mxu0 0.0
    %846 = vmatpush.msra.mxu0 0.0
    %847 = vmatpush.msra.mxu0 0.0
    %848 = vmatpush.msra.mxu0 0.0
    %849 = vmatpush.msra.mxu0 0.0
    %850 = vmatpush.msra.mxu0 0.0
    %851 = vmatpush.msra.mxu0 0.0
    %852 = vmatpush.msra.mxu0 0.0
    %853 = vmatpush.msra.mxu0 0.0
    %854 = vmatpush.msra.mxu0 0.0
    %855 = vmatpush.msra.mxu0 0.0
    %856 = vmatpush.msra.mxu0 0.0
    %857 = vmatpush.msra.mxu0 %v188
    %858 = vmatpush.msra.mxu0 %v185
    %859 = vmatpush.msra.mxu0 %v182
    %860 = vmatpush.msra.mxu0 %v179
    %861 = vmatmul.f32.gmra.mxu0 %v843
    %v862 = vpop.f32.mrf.mxu0
    %v863 = vadd.f32 0.0, %v862
    %864 = vdwg.mxu0
    %865 = vmatpush.msra.mxu0 0.0
    %866 = vmatpush.msra.mxu0 0.0
    %867 = vmatpush.msra.mxu0 0.0
    %868 = vmatpush.msra.mxu0 0.0
    %869 = vmatpush.msra.mxu0 0.0
    %870 = vmatpush.msra.mxu0 0.0
    %871 = vmatpush.msra.mxu0 0.0
    %872 = vmatpush.msra.mxu0 0.0
    %873 = vmatpush.msra.mxu0 0.0
    %874 = vmatpush.msra.mxu0 0.0
    %875 = vmatpush.msra.mxu0 0.0
    %876 = vmatpush.msra.mxu0 0.0
    %877 = vmatpush.msra.mxu0 %v189
    %878 = vmatpush.msra.mxu0 %v186
    %879 = vmatpush.msra.mxu0 %v183
    %880 = vmatpush.msra.mxu0 %v180
    %881 = vmatmul.f32.gmra.mxu0 %v843
    %v882 = vpop.f32.mrf.mxu0
    %v883 = vadd.f32 0.0, %v882
    %884 = vdwg.mxu0
    %885 = vmatpush.msra.mxu0 0.0
    %886 = vmatpush.msra.mxu0 0.0
    %887 = vmatpush.msra.mxu0 0.0
    %888 = vmatpush.msra.mxu0 0.0
    %889 = vmatpush.msra.mxu0 0.0
    %890 = vmatpush.msra.mxu0 0.0
    %891 = vmatpush.msra.mxu0 0.0
    %892 = vmatpush.msra.mxu0 0.0
    %893 = vmatpush.msra.mxu0 0.0
    %894 = vmatpush.msra.mxu0 0.0
    %895 = vmatpush.msra.mxu0 0.0
    %896 = vmatpush.msra.mxu0 0.0
    %897 = vmatpush.msra.mxu0 %v190
    %898 = vmatpush.msra.mxu0 %v187
    %899 = vmatpush.msra.mxu0 %v184
    %900 = vmatpush.msra.mxu0 %v181
    %901 = vmatmul.f32.gmra.mxu0 %v843
    %v902 = vpop.f32.mrf.mxu0
    %v903 = vadd.f32 0.0, %v902
    %904 = vdwg.mxu0
    %v906 = vrot.slane %v863, 4
    %v908 = vadd.f32 %v131, %v906
    %v909 = vxor.u32 %v908, 2147483648
    %v910 = vmul.f32 %v909, 1.442695
    %v911 = vpow.pop %v910
    %v912 = vadd.f32 %v911, 1.0
    %v913 = vrcp.pop %v912
    %v914 = vmul.f32 %v912, %v913
    %v915 = vsub.f32 1.0, %v914
    %v916 = vmul.f32 %v913, %v915
    %v917 = vadd.f32 %v913, %v916
    %vm918 = vweird.f32 %v912
    %vm919 = vweird.f32 %v913
    %vm920 = vmor %vm918, %vm919
    %v921 = vsel %vm920, %v913, %v917
    %v922 = vand.u32 2147483647, %v912
    %vm923 = vcmp.eq.f32.partialorder %v922, 8.507059e+37
    %v924 = vand.u32 %v912, 2147483648
    %v925 = vor.u32 1.1754944e-38, %v924
    %v926 = vsel %vm923, %v925, %v921
    %v927 = vmul.f32 1.0, %v926
    %v929 = vrot.slane %v883, 4
    %v931 = vadd.f32 %v154, %v929
    %v932 = vxor.u32 %v931, 2147483648
    %v933 = vmul.f32 %v932, 1.442695
    %v934 = vpow.pop %v933
    %v935 = vadd.f32 %v934, 1.0
    %v936 = vrcp.pop %v935
    %v937 = vmul.f32 %v935, %v936
    %v938 = vsub.f32 1.0, %v937
    %v939 = vmul.f32 %v936, %v938
    %v940 = vadd.f32 %v936, %v939
    %vm941 = vweird.f32 %v935
    %vm942 = vweird.f32 %v936
    %vm943 = vmor %vm941, %vm942
    %v944 = vsel %vm943, %v936, %v940
    %v945 = vand.u32 2147483647, %v935
    %vm946 = vcmp.eq.f32.partialorder %v945, 8.507059e+37
    %v947 = vand.u32 %v935, 2147483648
    %v948 = vor.u32 1.1754944e-38, %v947
    %v949 = vsel %vm946, %v948, %v944
    %v950 = vmul.f32 1.0, %v949
    %v951 = vadd.f32 %v903, %v193
    %v953 = vrot.slane %v951, 4
    %v955 = vmul.f32 %v927, %v953
    %v956 = vadd.f32 %v177, %v955
    %v957 = vtanh.pop %v956
    %v958 = vsub.f32 1.0, %v950
    %v959 = vmul.f32 %v958, %v957
    %v960 = vrot.slane %v840, 6
    %v962 = vmul.f32 %v950, %v960
    %v963 = vadd.f32 %v959, %v962
    %v965 = vrot.slane %v963, 4
    %v966 = vsel %vm103, %v965, 0
    %968 = vmatpush.msra.mxu0 0.0
    %969 = vmatpush.msra.mxu0 0.0
    %970 = vmatpush.msra.mxu0 0.0
    %971 = vmatpush.msra.mxu0 0.0
    %972 = vmatpush.msra.mxu0 0.0
    %973 = vmatpush.msra.mxu0 0.0
    %974 = vmatpush.msra.mxu0 0.0
    %975 = vmatpush.msra.mxu0 0.0
    %976 = vmatpush.msra.mxu0 0.0
    %977 = vmatpush.msra.mxu0 0.0
    %978 = vmatpush.msra.mxu0 0.0
    %979 = vmatpush.msra.mxu0 0.0
    %980 = vmatpush.msra.mxu0 %v188
    %981 = vmatpush.msra.mxu0 %v185
    %982 = vmatpush.msra.mxu0 %v182
    %983 = vmatpush.msra.mxu0 %v179
    %984 = vmatmul.f32.gmra.mxu0 %v966
    %v985 = vpop.f32.mrf.mxu0
    %v986 = vadd.f32 0.0, %v985
    %987 = vdwg.mxu0
    %988 = vmatpush.msra.mxu0 0.0
    %989 = vmatpush.msra.mxu0 0.0
    %990 = vmatpush.msra.mxu0 0.0
    %991 = vmatpush.msra.mxu0 0.0
    %992 = vmatpush.msra.mxu0 0.0
    %993 = vmatpush.msra.mxu0 0.0
    %994 = vmatpush.msra.mxu0 0.0
    %995 = vmatpush.msra.mxu0 0.0
    %996 = vmatpush.msra.mxu0 0.0
    %997 = vmatpush.msra.mxu0 0.0
    %998 = vmatpush.msra.mxu0 0.0
    %999 = vmatpush.msra.mxu0 0.0
    %1000 = vmatpush.msra.mxu0 %v189
    %1001 = vmatpush.msra.mxu0 %v186
    %1002 = vmatpush.msra.mxu0 %v183
    %1003 = vmatpush.msra.mxu0 %v180
    %1004 = vmatmul.f32.gmra.mxu0 %v966
    %v1005 = vpop.f32.mrf.mxu0
    %v1006 = vadd.f32 0.0, %v1005
    %1007 = vdwg.mxu0
    %1008 = vmatpush.msra.mxu0 0.0
    %1009 = vmatpush.msra.mxu0 0.0
    %1010 = vmatpush.msra.mxu0 0.0
    %1011 = vmatpush.msra.mxu0 0.0
    %1012 = vmatpush.msra.mxu0 0.0
    %1013 = vmatpush.msra.mxu0 0.0
    %1014 = vmatpush.msra.mxu0 0.0
    %1015 = vmatpush.msra.mxu0 0.0
    %1016 = vmatpush.msra.mxu0 0.0
    %1017 = vmatpush.msra.mxu0 0.0
    %1018 = vmatpush.msra.mxu0 0.0
    %1019 = vmatpush.msra.mxu0 0.0
    %1020 = vmatpush.msra.mxu0 %v190
    %1021 = vmatpush.msra.mxu0 %v187
    %1022 = vmatpush.msra.mxu0 %v184
    %1023 = vmatpush.msra.mxu0 %v181
    %1024 = vmatmul.f32.gmra.mxu0 %v966
    %v1025 = vpop.f32.mrf.mxu0
    %v1026 = vadd.f32 0.0, %v1025
    %1027 = vdwg.mxu0
    %v1029 = vrot.slane %v986, 2
    %v1031 = vadd.f32 %v131, %v1029
    %v1032 = vxor.u32 %v1031, 2147483648
    %v1033 = vmul.f32 %v1032, 1.442695
    %v1034 = vpow.pop %v1033
    %v1035 = vadd.f32 %v1034, 1.0
    %v1036 = vrcp.pop %v1035
    %v1037 = vmul.f32 %v1035, %v1036
    %v1038 = vsub.f32 1.0, %v1037
    %v1039 = vmul.f32 %v1036, %v1038
    %v1040 = vadd.f32 %v1036, %v1039
    %vm1041 = vweird.f32 %v1035
    %vm1042 = vweird.f32 %v1036
    %vm1043 = vmor %vm1041, %vm1042
    %v1044 = vsel %vm1043, %v1036, %v1040
    %v1045 = vand.u32 2147483647, %v1035
    %vm1046 = vcmp.eq.f32.partialorder %v1045, 8.507059e+37
    %v1047 = vand.u32 %v1035, 2147483648
    %v1048 = vor.u32 1.1754944e-38, %v1047
    %v1049 = vsel %vm1046, %v1048, %v1044
    %v1050 = vmul.f32 1.0, %v1049
    %v1052 = vrot.slane %v1006, 2
    %v1054 = vadd.f32 %v154, %v1052
    %v1055 = vxor.u32 %v1054, 2147483648
    %v1056 = vmul.f32 %v1055, 1.442695
    %v1057 = vpow.pop %v1056
    %v1058 = vadd.f32 %v1057, 1.0
    %v1059 = vrcp.pop %v1058
    %v1060 = vmul.f32 %v1058, %v1059
    %v1061 = vsub.f32 1.0, %v1060
    %v1062 = vmul.f32 %v1059, %v1061
    %v1063 = vadd.f32 %v1059, %v1062
    %vm1064 = vweird.f32 %v1058
    %vm1065 = vweird.f32 %v1059
    %vm1066 = vmor %vm1064, %vm1065
    %v1067 = vsel %vm1066, %v1059, %v1063
    %v1068 = vand.u32 2147483647, %v1058
    %vm1069 = vcmp.eq.f32.partialorder %v1068, 8.507059e+37
    %v1070 = vand.u32 %v1058, 2147483648
    %v1071 = vor.u32 1.1754944e-38, %v1070
    %v1072 = vsel %vm1069, %v1071, %v1067
    %v1073 = vmul.f32 1.0, %v1072
    %v1074 = vadd.f32 %v1026, %v193
    %v1076 = vrot.slane %v1074, 2
    %v1078 = vmul.f32 %v1050, %v1076
    %v1079 = vadd.f32 %v177, %v1078
    %v1080 = vtanh.pop %v1079
    %v1081 = vsub.f32 1.0, %v1073
    %v1082 = vmul.f32 %v1081, %v1080
    %v1083 = vrot.slane %v963, 6
    %v1085 = vmul.f32 %v1073, %v1083
    %v1086 = vadd.f32 %v1082, %v1085
    %v1087 = vsel %vm56, %v237, %v359
    %vm1088 = vcmask 1043456
    %v1089 = vsel %vm1088, %v1087, %v482
    %vm1090 = vcmask 1045504
    %v1091 = vsel %vm1090, %v1089, %v605
    %v1092 = vsel %vm56, %v718, %v840
    %v1093 = vsel %vm1088, %v1092, %v963
    %v1094 = vsel %vm1090, %v1093, %v1086
    %1095 = vst.msk [vmem:[%s6] sm:$0xff] %vm103, %v1091
    %1096 = vst.msk [vmem:[%s6 + $0x8] sm:$0xff] %vm103, %v1094
    %vm1097 = vcmask 261126
    %1098 = vst.msk [vmem:[#allocation2 - $0x6] sm:$0xc0] %vm1097, %v1086
    // Predicated region
    $region26: #{encoder_forward.1} parent=1 // pred_check
      _
    $region27: #{encoder_forward.1} parent=1 // pred_check_branch
      %1100 = sbr.rel (0) target = $region29
    $region28: #{encoder_forward.1} parent=1 // pred_region
      _
    $region29: #{encoder_forward.1} parent=1 // pred_fallthru
      _
    // Predicated region
    $region30: #{encoder_forward.1} parent=1 // pred_check
      _
    $region31: #{encoder_forward.1} parent=1 // pred_check_branch
      %1102 = sbr.rel (0) target = $region33
    $region32: #{encoder_forward.1} parent=1 // pred_region
      %1104 = vsyncadd [#allocation3], 0
      %s1106 = sshll.u32 [#allocation2], 4
      %s1107 = int_to_ptr.vmem [resolvable:$true] %s1106
      %s1108 = sshll.u32 %s7, 4
      %s1109 = int_to_ptr.hbm [resolvable:$true] %s1108
      %1111 = dma.vmem_to_hbm [thread:$0]  %s1107, 32, %s1109, [#allocation3]
    $region33: #{encoder_forward.1} parent=1 // pred_fallthru
      _
    // Predicated region
    $region34: #{encoder_forward.1} parent=1 // pred_check
      _
    $region35: #{encoder_forward.1} parent=1 // pred_check_branch
      %1113 = sbr.rel (0) target = $region37
    $region36: #{encoder_forward.1} parent=1 // pred_region
      _
    $region37: #{encoder_forward.1} parent=1 // pred_fallthru
      _
    // Predicated region
    $region38: #{encoder_forward.1} parent=1 // pred_check
      _
    $region39: #{encoder_forward.1} parent=1 // pred_check_branch
      %1115 = sbr.rel (0) target = $region41
    $region40: #{encoder_forward.1} parent=1 // pred_region
      %1117 = dma.done [#allocation3], 32
    $region41: #{encoder_forward.1} parent=1 // pred_fallthru
      _
    %1118 = vsyncpa [#allocation3], 1

</llo_original>
